<compile_context>
chip_gen: v7x
topology: tpu7x:2x2x1
jax: 0.10.0
libtpu: 0.0.40
codegen_flags: <defaults>
</compile_context>

<pallas_src>
import functools

import jax
import jax.numpy as jnp
from jax.experimental import pallas as pl
from jax.experimental.pallas import tpu as pltpu


def _net3dseg_kernel(x_ref, wenc_ref, benc_ref, wh_ref, bh_ref, out_ref, *, m):
    # One tile of tile_n points; channel dims are the full array dims.
    # net_3d surrogate: per-point linear (center tap of the submanifold conv)
    # + identity-BN + ReLU. K=4 makes this a nearly empty MXU op, but it sits
    # entirely under the input-DMA slack at this size.
    h = jnp.dot(x_ref[...], wenc_ref[...],
                preferred_element_type=jnp.float32) + benc_ref[...]
    feats = jnp.maximum(h, 0.0)

    # Fused classification heads: [linear | linear2] in one MXU launch.
    logits = jnp.dot(feats, wh_ref[...],
                     preferred_element_type=jnp.float32) + bh_ref[...]

    # Single fused output block [feats | seg_logit | seg_logit2]:
    # one output DMA stream per grid step instead of two.
    out_ref[:, :m] = feats.astype(out_ref.dtype)
    out_ref[:, m:] = logits.astype(out_ref.dtype)


def _round_up(x, mult):
    return ((x + mult - 1) // mult) * mult


def _adaptive_tile(n, preferred=2048, min_steps=4):
    """Row tile: large enough to amortize per-step overhead, but keep >=
    min_steps grid steps so both v7x TensorCores get work under
    dimension_semantics=("parallel",) and the pipeline has steps to overlap.
    Always a multiple of 256 (satisfies the sublane-divisibility rule)."""
    per_step = _round_up(pl.cdiv(n, min_steps), 256)
    return int(max(256, min(preferred, per_step)))


@functools.partial(jax.jit, static_argnames=("tile_n", "dual_head", "out_dtype"))
def net3dseg_forward(x, params, *, tile_n=None, dual_head=True,
                     out_dtype=jnp.float32):
    """x: (N, in_channels) per-point features. Returns dict like the torch module."""
    n, c_in = x.shape
    m = params["w_enc"].shape[1]
    k = params["w1"].shape[1]

    if dual_head:
        # Fused head weights are precomputed at param-build time; fall back to
        # concatenating here only if they are absent.
        w_heads = params.get("w_heads")
        b_heads = params.get("b_heads")
        if w_heads is None or b_heads is None:
            w_heads = jnp.concatenate([params["w1"], params["w2"]], axis=1)
            b_heads = jnp.concatenate([params["b1"], params["b2"]], axis=1)
        h_out = 2 * k
    else:
        w_heads, b_heads = params["w1"], params["b1"]
        h_out = k

    if tile_n is None:
        tile_n = _adaptive_tile(n)
    # Ragged last block: Pallas masks the write-back past row n, so no
    # wrapper-side pad/slice round trip is needed.
    n_grid = pl.cdiv(n, tile_n)

    c_out = m + h_out
    out_itemsize = jnp.dtype(out_dtype).itemsize
    cost = pl.CostEstimate(
        flops=2 * n * (c_in * m + m * h_out),
        transcendentals=0,
        bytes_accessed=(4 * (n * c_in + c_in * m + m + m * h_out + h_out)
                        + out_itemsize * n * c_out),
    )

    full = lambda *shape: pl.BlockSpec(shape, lambda i: (0,) * len(shape))

    fused = pl.pallas_call(
        functools.partial(_net3dseg_kernel, m=m),
        out_shape=jax.ShapeDtypeStruct((n, c_out), out_dtype),
        grid_spec=pltpu.PrefetchScalarGridSpec(
            num_scalar_prefetch=0,
            grid=(n_grid,),
            in_specs=[
                pl.BlockSpec((tile_n, c_in), lambda i: (i, 0)),  # x (row-tiled)
                full(c_in, m),        # w_enc (resident across the grid)
                full(1, m),           # b_enc
                full(m, h_out),       # fused head weight [w1 | w2]
                full(1, h_out),       # fused head bias   [b1 | b2]
            ],
            out_specs=pl.BlockSpec((tile_n, c_out), lambda i: (i, 0)),
        ),
        compiler_params=pltpu.CompilerParams(
            dimension_semantics=("parallel",)),
        cost_estimate=cost,
    )(x, params["w_enc"], params["b_enc"], w_heads, b_heads)

    preds = {"feats": fused[:, :m], "seg_logit": fused[:, m:m + k]}
    if dual_head:
        preds["seg_logit2"] = fused[:, m + k:]
    return preds


def init_params(key, in_channels, m, num_classes):
    """Deterministic synthetic parameters (PyTorch shapes, pre-transposed).
    Also precomputes the fused dual-head weight/bias (hoists the concat out of
    the jitted forward)."""
    ks = jax.random.split(key, 6)
    # SubmanifoldConvolution center tap: (in_channels, m)
    w_enc = jax.random.normal(ks[0], (in_channels, m), jnp.float32) * 0.1
    b_enc = jnp.zeros((1, m), jnp.float32)
    # nn.Linear weights are (out, in) in torch; store transposed (in, out).
    w1 = jax.random.normal(ks[1], (num_classes, m), jnp.float32) * 0.1
    b1 = jax.random.normal(ks[2], (num_classes,), jnp.float32) * 0.01
    w2 = jax.random.normal(ks[3], (num_classes, m), jnp.float32) * 0.1
    b2 = jax.random.normal(ks[4], (num_classes,), jnp.float32) * 0.01
    w1_t, w2_t = jnp.transpose(w1), jnp.transpose(w2)
    b1_r, b2_r = b1.reshape(1, num_classes), b2.reshape(1, num_classes)
    return {
        "w_enc": w_enc,
        "b_enc": b_enc,
        "w1": w1_t,
        "b1": b1_r,
        "w2": w2_t,
        "b2": b2_r,
        # Pre-fused dual-head parameters (used when dual_head=True).
        "w_heads": jnp.concatenate([w1_t, w2_t], axis=1),
        "b_heads": jnp.concatenate([b1_r, b2_r], axis=1),
    }


def reference_forward(x, params, dual_head=True):
    h = x @ params["w_enc"] + params["b_enc"]
    feats = jnp.maximum(h, 0.0)
    preds = {"feats": feats, "seg_logit": feats @ params["w1"] + params["b1"]}
    if dual_head:
        preds["seg_logit2"] = feats @ params["w2"] + params["b2"]
    return preds


if __name__ == "__main__":
    # N points, in_channels per-point features, UNetSCN out_channels = m,
    # num_classes seg classes. N is deliberately NOT a multiple of the tile
    # size so the ragged last grid block is exercised (adaptive tile = 512
    # rows -> 4 grid steps, last one partial).
    N, IN_CHANNELS, M, NUM_CLASSES = 2000, 4, 16, 5
    key = jax.random.PRNGKey(0)
    kx, kp = jax.random.split(key)

    x = jax.random.normal(kx, (N, IN_CHANNELS), jnp.float32)
    params = init_params(kp, IN_CHANNELS, M, NUM_CLASSES)

    # f32 outputs (default): tight check against the pure-JAX reference.
    for dual_head in (True, False):
        preds = jax.block_until_ready(
            net3dseg_forward(x, params, dual_head=dual_head))
        ref = reference_forward(x, params, dual_head=dual_head)

        names = ("feats", "seg_logit") + (("seg_logit2",) if dual_head else ())
        for name in names:
            assert preds[name].shape == ref[name].shape, name
            assert jnp.allclose(preds[name], ref[name], atol=1e-5, rtol=1e-5), name
        if not dual_head:
            assert "seg_logit2" not in preds

    # bf16 outputs: halves HBM write traffic; accumulation stays f32.
    preds_bf16 = jax.block_until_ready(
        net3dseg_forward(x, params, dual_head=True, out_dtype=jnp.bfloat16))
    ref = reference_forward(x, params, dual_head=True)
    for name in ("feats", "seg_logit", "seg_logit2"):
        assert preds_bf16[name].dtype == jnp.bfloat16, name
        assert jnp.allclose(preds_bf16[name].astype(jnp.float32), ref[name],
                            atol=1e-2, rtol=1e-2), name

    print("KERNEL_OK")
</pallas_src>

<mosaic_0001>
module attributes {stable_mosaic.version = 11 : i64} {
  func.func @_net3dseg_kernel(%arg0: i32, %arg1: memref<512x4xf32, #tpu.memory_space<vmem>>, %arg2: memref<4x16xf32, #tpu.memory_space<vmem>>, %arg3: memref<1x16xf32, #tpu.memory_space<vmem>>, %arg4: memref<16x10xf32, #tpu.memory_space<vmem>>, %arg5: memref<1x10xf32, #tpu.memory_space<vmem>>, %arg6: memref<512x26xf32, #tpu.memory_space<vmem>>) attributes {dimension_semantics = [#tpu.dimension_semantics<parallel>], iteration_bounds = array<i64: 4>, scalar_prefetch = 0 : i64, scratch_operands = 0 : i64, tpu.core_type = #tpu.core_type<tc>, window_params = [{transform_indices = @transform_0, window_bounds = array<i64: 512, 4>}, {pipeline_mode = #tpu.pipeline_mode<synchronous>, transform_indices = @transform_1, window_bounds = array<i64: 4, 16>}, {pipeline_mode = #tpu.pipeline_mode<synchronous>, transform_indices = @transform_2, window_bounds = array<i64: 1, 16>}, {pipeline_mode = #tpu.pipeline_mode<synchronous>, transform_indices = @transform_3, window_bounds = array<i64: 16, 10>}, {pipeline_mode = #tpu.pipeline_mode<synchronous>, transform_indices = @transform_4, window_bounds = array<i64: 1, 10>}, {transform_indices = @transform_5, window_bounds = array<i64: 512, 26>}]} {
    %c0 = arith.constant 0 : index
    %c0_0 = arith.constant 0 : index
    %0 = vector.load %arg1[%c0, %c0_0] : memref<512x4xf32, #tpu.memory_space<vmem>>, vector<512x4xf32>
    %c0_1 = arith.constant 0 : index
    %c0_2 = arith.constant 0 : index
    %1 = vector.load %arg2[%c0_1, %c0_2] : memref<4x16xf32, #tpu.memory_space<vmem>>, vector<4x16xf32>
    %cst = arith.constant dense<0.000000e+00> : vector<512x16xf32>
    %2 = tpu.matmul %0, %1, %cst {dimension_numbers = #tpu.dot_dimension_numbers<[1], [0], [0], [1], [0, 0, 1, 1], [], []>} : vector<512x4xf32>, vector<4x16xf32>, vector<512x16xf32> -> vector<512x16xf32>
    %c0_3 = arith.constant 0 : index
    %c0_4 = arith.constant 0 : index
    %3 = vector.load %arg3[%c0_3, %c0_4] : memref<1x16xf32, #tpu.memory_space<vmem>>, vector<1x16xf32>
    %4 = vector.broadcast %3 : vector<1x16xf32> to vector<512x16xf32>
    %5 = arith.addf %2, %4 : vector<512x16xf32>
    %cst_5 = arith.constant 0.000000e+00 : f32
    %6 = vector.broadcast %cst_5 : f32 to vector<512x16xf32>
    %7 = arith.maximumf %5, %6 : vector<512x16xf32>
    %c0_6 = arith.constant 0 : index
    %c0_7 = arith.constant 0 : index
    %8 = vector.load %arg4[%c0_6, %c0_7] : memref<16x10xf32, #tpu.memory_space<vmem>>, vector<16x10xf32>
    %cst_8 = arith.constant dense<0.000000e+00> : vector<512x10xf32>
    %9 = tpu.matmul %7, %8, %cst_8 {dimension_numbers = #tpu.dot_dimension_numbers<[1], [0], [0], [1], [0, 0, 1, 1], [], []>} : vector<512x16xf32>, vector<16x10xf32>, vector<512x10xf32> -> vector<512x10xf32>
    %c0_9 = arith.constant 0 : index
    %c0_10 = arith.constant 0 : index
    %10 = vector.load %arg5[%c0_9, %c0_10] : memref<1x10xf32, #tpu.memory_space<vmem>>, vector<1x10xf32>
    %11 = vector.broadcast %10 : vector<1x10xf32> to vector<512x10xf32>
    %12 = arith.addf %9, %11 : vector<512x10xf32>
    %c0_11 = arith.constant 0 : index
    %c0_12 = arith.constant 0 : index
    %13 = vector.load %arg6[%c0_11, %c0_12] : memref<512x26xf32, #tpu.memory_space<vmem>>, vector<512x16xf32>
    tpu.vector_store %arg6[%c0_11, %c0_12], %7 {strides = array<i32>} : memref<512x26xf32, #tpu.memory_space<vmem>>, vector<512x16xf32>,
    %c0_13 = arith.constant 0 : index
    %c16 = arith.constant 16 : index
    %14 = vector.load %arg6[%c0_13, %c16] : memref<512x26xf32, #tpu.memory_space<vmem>>, vector<512x10xf32>
    tpu.vector_store %arg6[%c0_13, %c16], %12 {strides = array<i32>} : memref<512x26xf32, #tpu.memory_space<vmem>>, vector<512x10xf32>,
    return
  }
  func.func @transform_0(%arg0: i32) -> (i32, i32) {
    %c0_i32 = arith.constant 0 : i32
    %c0_i32_0 = arith.constant 0 : i32
    return %arg0, %c0_i32 : i32, i32
  }
  func.func @transform_1(%arg0: i32) -> (i32, i32) {
    %c0_i32 = arith.constant 0 : i32
    %c0_i32_0 = arith.constant 0 : i32
    %c0_i32_1 = arith.constant 0 : i32
    return %c0_i32, %c0_i32_0 : i32, i32
  }
  func.func @transform_2(%arg0: i32) -> (i32, i32) {
    %c0_i32 = arith.constant 0 : i32
    %c0_i32_0 = arith.constant 0 : i32
    %c0_i32_1 = arith.constant 0 : i32
    return %c0_i32, %c0_i32_0 : i32, i32
  }
  func.func @transform_3(%arg0: i32) -> (i32, i32) {
    %c0_i32 = arith.constant 0 : i32
    %c0_i32_0 = arith.constant 0 : i32
    %c0_i32_1 = arith.constant 0 : i32
    return %c0_i32, %c0_i32_0 : i32, i32
  }
  func.func @transform_4(%arg0: i32) -> (i32, i32) {
    %c0_i32 = arith.constant 0 : i32
    %c0_i32_0 = arith.constant 0 : i32
    %c0_i32_1 = arith.constant 0 : i32
    return %c0_i32, %c0_i32_0 : i32, i32
  }
  func.func @transform_5(%arg0: i32) -> (i32, i32) {
    %c0_i32 = arith.constant 0 : i32
    %c0_i32_0 = arith.constant 0 : i32
    return %arg0, %c0_i32 : i32, i32
  }
}

</mosaic_0001>

<llo_original>
// kernel: net3dseg_forward.1
$region0: #{net3dseg_forward.1}
  #allocation0 [shape = 'u32[]', space=smem, size = 0x4, offset = 0x4, fixed_abs, tag = 'smem constant byte address 0x4 - core index']
  #allocation1 [shape = 'u32[144,128]{1,0:T(1,128)}', space=vmem, size = 0x12000, scoped, tag = 'internal scratch']
  %s0 = inlined_call_operand.vmem [shape: f32[2000,4], index: 0, kind: input, shape index: {}]
  %s1 = inlined_call_operand.vmem [shape: f32[4,16], index: 1, kind: input, shape index: {}]
  %s2 = inlined_call_operand.vmem [shape: f32[1,16], index: 2, kind: input, shape index: {}]
  %s3 = inlined_call_operand.vmem [shape: f32[16,10], index: 3, kind: input, shape index: {}]
  %s4 = inlined_call_operand.vmem [shape: f32[1,10], index: 4, kind: input, shape index: {}]
  %s5 = inlined_call_operand.vmem [shape: f32[2000,26], index: 5, kind: output, shape index: {}]
  %s6 = sld [smem:[#allocation0]]
  $region101: #{net3dseg_forward.1} parent=0
    _
  %s8 = ssub.s32 1, %s6
  %s9 = scalar_select 0, %s8, %s6
  $region1: #{net3dseg_forward.1} parent=0
    #allocation2 [shape = 'u8[524288]{0}', space=vmem, size = 0x80000, scoped, tag = 'output window, operand 0']
    loop: start=0, step=1, limit=6
    $region2: #{net3dseg_forward.1} parent=1 // loop_pre_header
      _
    $region3: #{net3dseg_forward.1} parent=1 // loop_header
      %s11 = sphi 0, %s15
      %p12 = scmp.ge.s32.totalorder %s11, 6
      %s21 = sphi 0, %s23
      %s24 = sphi 0, %s21
      %s25 = sphi 0, %s24
      %s41 = sphi 0, %s25
      %s45 = sphi 0, %s45
      %s47 = sphi 0, %s45
      %s48 = sphi 0, %s47
      %s62 = sphi 0, %s48
      %s66 = sphi 0, %s66
      %s68 = sphi 0, %s66
      %s69 = sphi 0, %s68
      %s83 = sphi 0, %s69
      %s87 = sphi 0, %s87
      %s89 = sphi 0, %s87
      %s90 = sphi 0, %s89
      %s104 = sphi 0, %s90
      %s108 = sphi 0, %s108
      %s110 = sphi 0, %s108
      %s111 = sphi 0, %s110
      %s125 = sphi 0, %s111
      %s131 = sphi 0, %s133
      %s134 = sphi 0, %s131
      %s135 = sphi 0, %s134
      %s151 = sphi 0, %s135
    $region4: #{net3dseg_forward.1} parent=1 // loop_header_branch
      %14 = sbr.rel (%p12) target = $region8
    $region5: #{net3dseg_forward.1} parent=1 // loop_body
      %s16 = ssub.s32 %s11, 1
      %s17 = ssub.s32 %s11, 2
      %s18 = sadd.s32 %s11, 1
      %s19 = ssub.s32 %s11, %s18
      %p20 = scmp.eq.s32.totalorder %s19, 0
      %s22 = sadd.s32 %s21, 1
      %s23 = scalar_select %p20, %s21, %s22
      %p26 = pneg %p20
      %p27 = scmp.eq.s32.totalorder %s11, 3
      %p28 = por %p26, %p27
      %p29 = scmp.ne.s32.totalorder %s21, %s24
      %p30 = scmp.eq.s32.totalorder %s11, 0
      %p31 = por %p29, %p30
      %p32 = scmp.ne.s32.totalorder %s21, %s24
      %p33 = scmp.eq.s32.totalorder %s16, 3
      %p34 = por %p32, %p33
      %p35 = scmp.ne.s32.totalorder %s24, %s25
      %p36 = scmp.eq.s32.totalorder %s16, 0
      %p37 = por %p35, %p36
      %p38 = scmp.ne.s32.totalorder %s24, %s25
      %p39 = scmp.eq.s32.totalorder %s17, 3
      %p40 = por %p38, %p39
      %p42 = scmp.ne.s32.totalorder %s25, %s41
      %p43 = scmp.eq.s32.totalorder %s17, 0
      %p44 = por %p42, %p43
      %s46 = sadd.s32 %s45, 1
      %p49 = scmp.eq.s32.totalorder %s11, 3
      %p50 = scmp.ne.s32.totalorder %s45, %s47
      %p51 = scmp.eq.s32.totalorder %s11, 0
      %p52 = por %p50, %p51
      %p53 = scmp.ne.s32.totalorder %s45, %s47
      %p54 = scmp.eq.s32.totalorder %s16, 3
      %p55 = por %p53, %p54
      %p56 = scmp.ne.s32.totalorder %s47, %s48
      %p57 = scmp.eq.s32.totalorder %s16, 0
      %p58 = por %p56, %p57
      %p59 = scmp.ne.s32.totalorder %s47, %s48
      %p60 = scmp.eq.s32.totalorder %s17, 3
      %p61 = por %p59, %p60
      %p63 = scmp.ne.s32.totalorder %s48, %s62
      %p64 = scmp.eq.s32.totalorder %s17, 0
      %p65 = por %p63, %p64
      %s67 = sadd.s32 %s66, 1
      %p70 = scmp.eq.s32.totalorder %s11, 3
      %p71 = scmp.ne.s32.totalorder %s66, %s68
      %p72 = scmp.eq.s32.totalorder %s11, 0
      %p73 = por %p71, %p72
      %p74 = scmp.ne.s32.totalorder %s66, %s68
      %p75 = scmp.eq.s32.totalorder %s16, 3
      %p76 = por %p74, %p75
      %p77 = scmp.ne.s32.totalorder %s68, %s69
      %p78 = scmp.eq.s32.totalorder %s16, 0
      %p79 = por %p77, %p78
      %p80 = scmp.ne.s32.totalorder %s68, %s69
      %p81 = scmp.eq.s32.totalorder %s17, 3
      %p82 = por %p80, %p81
      %p84 = scmp.ne.s32.totalorder %s69, %s83
      %p85 = scmp.eq.s32.totalorder %s17, 0
      %p86 = por %p84, %p85
      %s88 = sadd.s32 %s87, 1
      %p91 = scmp.eq.s32.totalorder %s11, 3
      %p92 = scmp.ne.s32.totalorder %s87, %s89
      %p93 = scmp.eq.s32.totalorder %s11, 0
      %p94 = por %p92, %p93
      %p95 = scmp.ne.s32.totalorder %s87, %s89
      %p96 = scmp.eq.s32.totalorder %s16, 3
      %p97 = por %p95, %p96
      %p98 = scmp.ne.s32.totalorder %s89, %s90
      %p99 = scmp.eq.s32.totalorder %s16, 0
      %p100 = por %p98, %p99
      %p101 = scmp.ne.s32.totalorder %s89, %s90
      %p102 = scmp.eq.s32.totalorder %s17, 3
      %p103 = por %p101, %p102
      %p105 = scmp.ne.s32.totalorder %s90, %s104
      %p106 = scmp.eq.s32.totalorder %s17, 0
      %p107 = por %p105, %p106
      %s109 = sadd.s32 %s108, 1
      %p112 = scmp.eq.s32.totalorder %s11, 3
      %p113 = scmp.ne.s32.totalorder %s108, %s110
      %p114 = scmp.eq.s32.totalorder %s11, 0
      %p115 = por %p113, %p114
      %p116 = scmp.ne.s32.totalorder %s108, %s110
      %p117 = scmp.eq.s32.totalorder %s16, 3
      %p118 = por %p116, %p117
      %p119 = scmp.ne.s32.totalorder %s110, %s111
      %p120 = scmp.eq.s32.totalorder %s16, 0
      %p121 = por %p119, %p120
      %p122 = scmp.ne.s32.totalorder %s110, %s111
      %p123 = scmp.eq.s32.totalorder %s17, 3
      %p124 = por %p122, %p123
      %p126 = scmp.ne.s32.totalorder %s111, %s125
      %p127 = scmp.eq.s32.totalorder %s17, 0
      %p128 = por %p126, %p127
      %s129 = ssub.s32 %s11, %s18
      %p130 = scmp.eq.s32.totalorder %s129, 0
      %s132 = sadd.s32 %s131, 1
      %s133 = scalar_select %p130, %s131, %s132
      %p136 = pneg %p130
      %p137 = scmp.eq.s32.totalorder %s11, 3
      %p138 = por %p136, %p137
      %p139 = scmp.ne.s32.totalorder %s131, %s134
      %p140 = scmp.eq.s32.totalorder %s11, 0
      %p141 = por %p139, %p140
      %p142 = scmp.ne.s32.totalorder %s131, %s134
      %p143 = scmp.eq.s32.totalorder %s16, 3
      %p144 = por %p142, %p143
      %p145 = scmp.ne.s32.totalorder %s134, %s135
      %p146 = scmp.eq.s32.totalorder %s16, 0
      %p147 = por %p145, %p146
      %p148 = scmp.ne.s32.totalorder %s134, %s135
      %p149 = scmp.eq.s32.totalorder %s17, 3
      %p150 = por %p148, %p149
      %p152 = scmp.ne.s32.totalorder %s135, %s151
      %p153 = scmp.eq.s32.totalorder %s17, 0
      %p154 = por %p152, %p153
      %p155 = scmp.le.s32.totalorder 1, %s11
      %p156 = scmp.lt.s32.totalorder %s11, 5
      %p157 = pnand %p155, %p156
      %p158 = pneg %p157
      // Predicated region
      $region9: #{net3dseg_forward.1} parent=5 // pred_check
        _
      $region10: #{net3dseg_forward.1} parent=5 // pred_check_branch
        %160 = sbr.rel (%p157) target = $region12
      $region11: #{net3dseg_forward.1} parent=5 // pred_region
        %s161 = ssub.s32 %s11, 1
        // Predicated region
        $region13: #{net3dseg_forward.1} parent=11 // pred_check
          %p162 = pneg %p58
        $region14: #{net3dseg_forward.1} parent=11 // pred_check_branch
          %164 = sbr.rel (%p162) target = $region16
        $region15: #{net3dseg_forward.1} parent=11 // pred_region
          _
        $region16: #{net3dseg_forward.1} parent=11 // pred_fallthru
          _
        // Predicated region
        $region17: #{net3dseg_forward.1} parent=11 // pred_check
          %p165 = pneg %p79
        $region18: #{net3dseg_forward.1} parent=11 // pred_check_branch
          %167 = sbr.rel (%p165) target = $region20
        $region19: #{net3dseg_forward.1} parent=11 // pred_region
          _
        $region20: #{net3dseg_forward.1} parent=11 // pred_fallthru
          _
        // Predicated region
        $region21: #{net3dseg_forward.1} parent=11 // pred_check
          %p168 = pneg %p100
        $region22: #{net3dseg_forward.1} parent=11 // pred_check_branch
          %170 = sbr.rel (%p168) target = $region24
        $region23: #{net3dseg_forward.1} parent=11 // pred_region
          _
        $region24: #{net3dseg_forward.1} parent=11 // pred_fallthru
          _
        // Predicated region
        $region25: #{net3dseg_forward.1} parent=11 // pred_check
          %p171 = pneg %p121
        $region26: #{net3dseg_forward.1} parent=11 // pred_check_branch
          %173 = sbr.rel (%p171) target = $region28
        $region27: #{net3dseg_forward.1} parent=11 // pred_region
          _
        $region28: #{net3dseg_forward.1} parent=11 // pred_fallthru
          _
      $region12: #{net3dseg_forward.1} parent=5 // pred_fallthru
        _
      %p174 = scmp.lt.s32.totalorder %s11, 4
      // Predicated region
      $region29: #{net3dseg_forward.1} parent=5 // pred_check
        %p175 = pneg %p174
      $region30: #{net3dseg_forward.1} parent=5 // pred_check_branch
        %177 = sbr.rel (%p175) target = $region32
      $region31: #{net3dseg_forward.1} parent=5 // pred_region
        // Predicated region
        $region33: #{net3dseg_forward.1} parent=31 // pred_check
          %p178 = pneg %p31
        $region34: #{net3dseg_forward.1} parent=31 // pred_check_branch
          %180 = sbr.rel (%p178) target = $region36
        $region35: #{net3dseg_forward.1} parent=31 // pred_region
          %s181 = smul.u32 64, %s11
          %s182 = ssub.s32 250, %s181
          %p183 = scmp.lt.s32.totalorder %s182, 64
          %s184 = scalar_select %p183, %s182, 64
          %s185 = smul.u32 128, %s184
          %p186 = scmp.lt.s32.totalorder %s181, 249
          %s187 = scalar_select %p186, %s181, 249
          %s188 = smul.addr %s187, 8
          %s189 = scalar_lea.vmem %s0, %s188
          %s190 = smul.u32 64, %s11
          %s191 = ssub.s32 250, %s190
          %p192 = scmp.lt.s32.totalorder %s191, 64
          %s193 = scalar_select %p192, %s191, 64
          %s194 = smul.u32 128, %s193
        $region36: #{net3dseg_forward.1} parent=31 // pred_fallthru
          _
      $region32: #{net3dseg_forward.1} parent=5 // pred_fallthru
        _
      %p195 = scmp.le.s32.totalorder 1, %s11
      %p196 = scmp.lt.s32.totalorder %s11, 5
      %p197 = pnand %p195, %p196
      %p198 = pneg %p197
      // Predicated region
      $region37: #{net3dseg_forward.1} parent=5 // pred_check
        _
      $region38: #{net3dseg_forward.1} parent=5 // pred_check_branch
        %200 = sbr.rel (%p197) target = $region40
      $region39: #{net3dseg_forward.1} parent=5 // pred_region
        %s201 = ssub.s32 %s11, 1
        %s202 = smul.u32 64, %s16
        %s203 = ssub.s32 250, %s202
        %p204 = scmp.lt.s32.totalorder %s203, 64
        %s205 = scalar_select %p204, %s203, 64
        %s206 = smul.u32 128, %s205
        %p207 = scmp.lt.s32.totalorder %s202, 249
        %s208 = scalar_select %p207, %s202, 249
        %s209 = smul.addr %s208, 8
        %s210 = scalar_lea.vmem %s0, %s209
        %p211 = pneg %p37
        %p212 = pneg %p34
        %p213 = pneg %p58
        %p214 = pneg %p55
        %p215 = pneg %p79
        %p216 = pneg %p76
        %p217 = pneg %p100
        %p218 = pneg %p97
        %p219 = pneg %p121
        %p220 = pneg %p118
        %p221 = pneg %p147
        %p222 = pneg %p144
        %s223 = sand.u32 %s134, 1
        %s224 = sand.u32 %s134, 1
        %s225 = smul.addr %s224, 512
        %s226 = scalar_lea.vmem [#allocation2], %s225
        %s227 = smul.u32 64, %s16
        %s228 = ssub.s32 250, %s227
        %p229 = scmp.lt.s32.totalorder %s228, 64
        %s230 = scalar_select %p229, %s228, 64
        %s231 = smul.u32 128, %s230
        %p232 = scmp.lt.s32.totalorder %s227, 249
        %s233 = scalar_select %p232, %s227, 249
        %s234 = smul.addr %s233, 8
        %s235 = scalar_lea.vmem %s0, %s234
        %s236 = smul.u32 64, %s16
        %s237 = ssub.s32 250, %s236
        %p238 = scmp.lt.s32.totalorder %s237, 64
        %s239 = scalar_select %p238, %s237, 64
        %s240 = smul.u32 128, %s239
        %s241 = smul.u32 64, %s16
        %s242 = ssub.s32 250, %s241
        %p243 = scmp.lt.s32.totalorder %s242, 64
        %s244 = scalar_select %p243, %s242, 64
        %s245 = smul.u32 128, %s244
        %v246 = vld [vmem:[%s235] sm:$0xff]
        %v247 = vld [vmem:[%s235 + $0x8] sm:$0xff]
        %v248 = vld [vmem:[%s235 + $0x10] sm:$0xff]
        %v249 = vld [vmem:[%s235 + $0x18] sm:$0xff]
        %v250 = vld [vmem:[%s235 + $0x20] sm:$0xff]
        %v251 = vld [vmem:[%s235 + $0x28] sm:$0xff]
        %v252 = vld [vmem:[%s235 + $0x30] sm:$0xff]
        %v253 = vld [vmem:[%s235 + $0x38] sm:$0xff]
        %v254 = vld [vmem:[%s235 + $0x40] sm:$0xff]
        %v255 = vld [vmem:[%s235 + $0x48] sm:$0xff]
        %v256 = vld [vmem:[%s235 + $0x50] sm:$0xff]
        %v257 = vld [vmem:[%s235 + $0x58] sm:$0xff]
        %v258 = vld [vmem:[%s235 + $0x60] sm:$0xff]
        %v259 = vld [vmem:[%s235 + $0x68] sm:$0xff]
        %v260 = vld [vmem:[%s235 + $0x70] sm:$0xff]
        %v261 = vld [vmem:[%s235 + $0x78] sm:$0xff]
        %v262 = vld [vmem:[%s235 + $0x80] sm:$0xff]
        %v263 = vld [vmem:[%s235 + $0x88] sm:$0xff]
        %v264 = vld [vmem:[%s235 + $0x90] sm:$0xff]
        %v265 = vld [vmem:[%s235 + $0x98] sm:$0xff]
        %v266 = vld [vmem:[%s235 + $0xa0] sm:$0xff]
        %v267 = vld [vmem:[%s235 + $0xa8] sm:$0xff]
        %v268 = vld [vmem:[%s235 + $0xb0] sm:$0xff]
        %v269 = vld [vmem:[%s235 + $0xb8] sm:$0xff]
        %v270 = vld [vmem:[%s235 + $0xc0] sm:$0xff]
        %v271 = vld [vmem:[%s235 + $0xc8] sm:$0xff]
        %v272 = vld [vmem:[%s235 + $0xd0] sm:$0xff]
        %v273 = vld [vmem:[%s235 + $0xd8] sm:$0xff]
        %v274 = vld [vmem:[%s235 + $0xe0] sm:$0xff]
        %v275 = vld [vmem:[%s235 + $0xe8] sm:$0xff]
        %v276 = vld [vmem:[%s235 + $0xf0] sm:$0xff]
        %v277 = vld [vmem:[%s235 + $0xf8] sm:$0xff]
        %v278 = vld [vmem:[%s235 + $0x100] sm:$0xff]
        %v279 = vld [vmem:[%s235 + $0x108] sm:$0xff]
        %v280 = vld [vmem:[%s235 + $0x110] sm:$0xff]
        %v281 = vld [vmem:[%s235 + $0x118] sm:$0xff]
        %v282 = vld [vmem:[%s235 + $0x120] sm:$0xff]
        %v283 = vld [vmem:[%s235 + $0x128] sm:$0xff]
        %v284 = vld [vmem:[%s235 + $0x130] sm:$0xff]
        %v285 = vld [vmem:[%s235 + $0x138] sm:$0xff]
        %v286 = vld [vmem:[%s235 + $0x140] sm:$0xff]
        %v287 = vld [vmem:[%s235 + $0x148] sm:$0xff]
        %v288 = vld [vmem:[%s235 + $0x150] sm:$0xff]
        %v289 = vld [vmem:[%s235 + $0x158] sm:$0xff]
        %v290 = vld [vmem:[%s235 + $0x160] sm:$0xff]
        %v291 = vld [vmem:[%s235 + $0x168] sm:$0xff]
        %v292 = vld [vmem:[%s235 + $0x170] sm:$0xff]
        %v293 = vld [vmem:[%s235 + $0x178] sm:$0xff]
        %v294 = vld [vmem:[%s235 + $0x180] sm:$0xff]
        %v295 = vld [vmem:[%s235 + $0x188] sm:$0xff]
        %v296 = vld [vmem:[%s235 + $0x190] sm:$0xff]
        %v297 = vld [vmem:[%s235 + $0x198] sm:$0xff]
        %v298 = vld [vmem:[%s235 + $0x1a0] sm:$0xff]
        %v299 = vld [vmem:[%s235 + $0x1a8] sm:$0xff]
        %v300 = vld [vmem:[%s235 + $0x1b0] sm:$0xff]
        %v301 = vld [vmem:[%s235 + $0x1b8] sm:$0xff]
        %v302 = vld [vmem:[%s235 + $0x1c0] sm:$0xff]
        %v303 = vld [vmem:[%s235 + $0x1c8] sm:$0xff]
        %v304 = vld [vmem:[%s235 + $0x1d0] sm:$0xff]
        %v305 = vld [vmem:[%s235 + $0x1d8] sm:$0xff]
        %v306 = vld [vmem:[%s235 + $0x1e0] sm:$0xff]
        %v307 = vld [vmem:[%s235 + $0x1e8] sm:$0xff]
        %v308 = vld [vmem:[%s235 + $0x1f0] sm:$0xff]
        %v309 = vld [vmem:[%s235 + $0x1f8] sm:$0xff]
        %v310 = vld [vmem:[%s1] sm:$0xf]
        %v311 = vld [vmem:[%s2] sm:$0x1]
        %v313 = vlaneseq
        %v314 = vshrl.u32 %v313, 7
        %v315 = vsub.s32 0, %v314
        %v316 = vrot.slane %v311, %v315
        %vm318 = vcmask 31744
        %v320 = vsel %vm318, %v246, 0
        %v323 = vsel %vm318, %v247, 0
        %v326 = vsel %vm318, %v248, 0
        %v329 = vsel %vm318, %v249, 0
        %v332 = vsel %vm318, %v250, 0
        %v335 = vsel %vm318, %v251, 0
        %v338 = vsel %vm318, %v252, 0
        %v341 = vsel %vm318, %v253, 0
        %v344 = vsel %vm318, %v254, 0
        %v347 = vsel %vm318, %v255, 0
        %v350 = vsel %vm318, %v256, 0
        %v353 = vsel %vm318, %v257, 0
        %v356 = vsel %vm318, %v258, 0
        %v359 = vsel %vm318, %v259, 0
        %v362 = vsel %vm318, %v260, 0
        %v365 = vsel %vm318, %v261, 0
        %v368 = vsel %vm318, %v262, 0
        %v371 = vsel %vm318, %v263, 0
        %v374 = vsel %vm318, %v264, 0
        %v377 = vsel %vm318, %v265, 0
        %v380 = vsel %vm318, %v266, 0
        %v383 = vsel %vm318, %v267, 0
        %v386 = vsel %vm318, %v268, 0
        %v389 = vsel %vm318, %v269, 0
        %v392 = vsel %vm318, %v270, 0
        %v395 = vsel %vm318, %v271, 0
        %v398 = vsel %vm318, %v272, 0
        %v401 = vsel %vm318, %v273, 0
        %v404 = vsel %vm318, %v274, 0
        %v407 = vsel %vm318, %v275, 0
        %v410 = vsel %vm318, %v276, 0
        %v413 = vsel %vm318, %v277, 0
        %v416 = vsel %vm318, %v278, 0
        %v419 = vsel %vm318, %v279, 0
        %v422 = vsel %vm318, %v280, 0
        %v425 = vsel %vm318, %v281, 0
        %v428 = vsel %vm318, %v282, 0
        %v431 = vsel %vm318, %v283, 0
        %v434 = vsel %vm318, %v284, 0
        %v437 = vsel %vm318, %v285, 0
        %v440 = vsel %vm318, %v286, 0
        %v443 = vsel %vm318, %v287, 0
        %v446 = vsel %vm318, %v288, 0
        %v449 = vsel %vm318, %v289, 0
        %v452 = vsel %vm318, %v290, 0
        %v455 = vsel %vm318, %v291, 0
        %v458 = vsel %vm318, %v292, 0
        %v461 = vsel %vm318, %v293, 0
        %v464 = vsel %vm318, %v294, 0
        %v467 = vsel %vm318, %v295, 0
        %v470 = vsel %vm318, %v296, 0
        %v473 = vsel %vm318, %v297, 0
        %v476 = vsel %vm318, %v298, 0
        %v479 = vsel %vm318, %v299, 0
        %v482 = vsel %vm318, %v300, 0
        %v485 = vsel %vm318, %v301, 0
        %v488 = vsel %vm318, %v302, 0
        %v491 = vsel %vm318, %v303, 0
        %v494 = vsel %vm318, %v304, 0
        %v497 = vsel %vm318, %v305, 0
        %v500 = vsel %vm318, %v306, 0
        %v503 = vsel %vm318, %v307, 0
        %v506 = vsel %vm318, %v308, 0
        %v509 = vsel %vm318, %v309, 0
        %vm511 = vcmask 1043456
        %v513 = vsel %vm511, %v310, 0
        %515 = vmatprep.subr.mxu0 0.0
        %516 = vmatpush1.msra.mxu0 %v513
        %517 = vmatprep.subr.mxu0 0.0
        %518 = vmatpush1.msra.mxu0 0.0
        %519 = vmatprep.subr.mxu0 0.0
        %520 = vmatpush1.msra.mxu0 0.0
        %521 = vmatprep.subr.mxu0 0.0
        %522 = vmatpush1.msra.mxu0 0.0
        %523 = vmatprep.subr.mxu0 0.0
        %524 = vmatpush1.msra.mxu0 0.0
        %525 = vmatprep.subr.mxu0 0.0
        %526 = vmatpush1.msra.mxu0 0.0
        %527 = vmatprep.subr.mxu0 0.0
        %528 = vmatpush1.msra.mxu0 0.0
        %529 = vmatprep.subr.mxu0 0.0
        %530 = vmatpush1.msra.mxu0 0.0
        %531 = vmatprep.subr.mxu0 0.0
        %532 = vmatpush1.msra.mxu0 0.0
        %533 = vmatprep.subr.mxu0 0.0
        %534 = vmatpush1.msra.mxu0 0.0
        %535 = vmatprep.subr.mxu0 0.0
        %536 = vmatpush1.msra.mxu0 0.0
        %537 = vmatprep.subr.mxu0 0.0
        %538 = vmatpush1.msra.mxu0 0.0
        %539 = vmatprep.subr.mxu0 0.0
        %540 = vmatpush1.msra.mxu0 0.0
        %541 = vmatprep.subr.mxu0 0.0
        %542 = vmatpush1.msra.mxu0 0.0
        %543 = vmatprep.subr.mxu0 0.0
        %544 = vmatpush1.msra.mxu0 0.0
        %545 = vmatprep.subr.mxu0 0.0
        %546 = vmatpush1.msra.mxu0 0.0
        %547 = vmatprep.subr.mxu0 0.0
        %548 = vmatpush1.msra.mxu0 0.0
        %549 = vmatprep.subr.mxu0 0.0
        %550 = vmatpush1.msra.mxu0 0.0
        %551 = vmatprep.subr.mxu0 0.0
        %552 = vmatpush1.msra.mxu0 0.0
        %553 = vmatprep.subr.mxu0 0.0
        %554 = vmatpush1.msra.mxu0 0.0
        %555 = vmatprep.subr.mxu0 0.0
        %556 = vmatpush1.msra.mxu0 0.0
        %557 = vmatprep.subr.mxu0 0.0
        %558 = vmatpush1.msra.mxu0 0.0
        %559 = vmatprep.subr.mxu0 0.0
        %560 = vmatpush1.msra.mxu0 0.0
        %561 = vmatprep.subr.mxu0 0.0
        %562 = vmatpush1.msra.mxu0 0.0
        %563 = vmatprep.subr.mxu0 0.0
        %564 = vmatpush1.msra.mxu0 0.0
        %565 = vmatprep.subr.mxu0 0.0
        %566 = vmatpush1.msra.mxu0 0.0
        %567 = vmatprep.subr.mxu0 0.0
        %568 = vmatpush1.msra.mxu0 0.0
        %569 = vmatprep.subr.mxu0 0.0
        %570 = vmatpush1.msra.mxu0 0.0
        %571 = vmatprep.subr.mxu0 0.0
        %572 = vmatpush1.msra.mxu0 0.0
        %573 = vmatprep.subr.mxu0 0.0
        %574 = vmatpush1.msra.mxu0 0.0
        %575 = vmatprep.subr.mxu0 0.0
        %576 = vmatpush1.msra.mxu0 0.0
        %577 = vmatprep.subr.mxu0 0.0
        %578 = vmatpush1.msra.mxu0 0.0
        %579 = vmatprep.mubr.f32.mxu0 0.0
        %580 = vmatmul.mubr.f32.gmra.mrb[0].mxu0 %v320
        %v581 = vpop.f32.mrb[0].mxu0
        %v582 = vadd.f32 %v316, %v581
        %v583 = vpop.f32.mrb[0].mxu0
        %584 = vmatprep.mubr.f32.mxu0 0.0
        %585 = vmatmul.mubr.f32.gmra.mrb[0].mxu0 %v323
        %v586 = vpop.f32.mrb[0].mxu0
        %v587 = vadd.f32 %v316, %v586
        %v588 = vpop.f32.mrb[0].mxu0
        %589 = vmatprep.mubr.f32.mxu0 0.0
        %590 = vmatmul.mubr.f32.gmra.mrb[0].mxu0 %v326
        %v591 = vpop.f32.mrb[0].mxu0
        %v592 = vadd.f32 %v316, %v591
        %v593 = vpop.f32.mrb[0].mxu0
        %594 = vmatprep.mubr.f32.mxu0 0.0
        %595 = vmatmul.mubr.f32.gmra.mrb[0].mxu0 %v329
        %v596 = vpop.f32.mrb[0].mxu0
        %v597 = vadd.f32 %v316, %v596
        %v598 = vpop.f32.mrb[0].mxu0
        %599 = vmatprep.mubr.f32.mxu0 0.0
        %600 = vmatmul.mubr.f32.gmra.mrb[0].mxu0 %v332
        %v601 = vpop.f32.mrb[0].mxu0
        %v602 = vadd.f32 %v316, %v601
        %v603 = vpop.f32.mrb[0].mxu0
        %604 = vmatprep.mubr.f32.mxu0 0.0
        %605 = vmatmul.mubr.f32.gmra.mrb[0].mxu0 %v335
        %v606 = vpop.f32.mrb[0].mxu0
        %v607 = vadd.f32 %v316, %v606
        %v608 = vpop.f32.mrb[0].mxu0
        %609 = vmatprep.mubr.f32.mxu0 0.0
        %610 = vmatmul.mubr.f32.gmra.mrb[0].mxu0 %v338
        %v611 = vpop.f32.mrb[0].mxu0
        %v612 = vadd.f32 %v316, %v611
        %v613 = vpop.f32.mrb[0].mxu0
        %614 = vmatprep.mubr.f32.mxu0 0.0
        %615 = vmatmul.mubr.f32.gmra.mrb[0].mxu0 %v341
        %v616 = vpop.f32.mrb[0].mxu0
        %v617 = vadd.f32 %v316, %v616
        %v618 = vpop.f32.mrb[0].mxu0
        %619 = vmatprep.mubr.f32.mxu0 0.0
        %620 = vmatmul.mubr.f32.gmra.mrb[0].mxu0 %v344
        %v621 = vpop.f32.mrb[0].mxu0
        %v622 = vadd.f32 %v316, %v621
        %v623 = vpop.f32.mrb[0].mxu0
        %624 = vmatprep.mubr.f32.mxu0 0.0
        %625 = vmatmul.mubr.f32.gmra.mrb[0].mxu0 %v347
        %v626 = vpop.f32.mrb[0].mxu0
        %v627 = vadd.f32 %v316, %v626
        %v628 = vpop.f32.mrb[0].mxu0
        %629 = vmatprep.mubr.f32.mxu0 0.0
        %630 = vmatmul.mubr.f32.gmra.mrb[0].mxu0 %v350
        %v631 = vpop.f32.mrb[0].mxu0
        %v632 = vadd.f32 %v316, %v631
        %v633 = vpop.f32.mrb[0].mxu0
        %634 = vmatprep.mubr.f32.mxu0 0.0
        %635 = vmatmul.mubr.f32.gmra.mrb[0].mxu0 %v353
        %v636 = vpop.f32.mrb[0].mxu0
        %v637 = vadd.f32 %v316, %v636
        %v638 = vpop.f32.mrb[0].mxu0
        %639 = vmatprep.mubr.f32.mxu0 0.0
        %640 = vmatmul.mubr.f32.gmra.mrb[0].mxu0 %v356
        %v641 = vpop.f32.mrb[0].mxu0
        %v642 = vadd.f32 %v316, %v641
        %v643 = vpop.f32.mrb[0].mxu0
        %644 = vmatprep.mubr.f32.mxu0 0.0
        %645 = vmatmul.mubr.f32.gmra.mrb[0].mxu0 %v359
        %v646 = vpop.f32.mrb[0].mxu0
        %v647 = vadd.f32 %v316, %v646
        %v648 = vpop.f32.mrb[0].mxu0
        %649 = vmatprep.mubr.f32.mxu0 0.0
        %650 = vmatmul.mubr.f32.gmra.mrb[0].mxu0 %v362
        %v651 = vpop.f32.mrb[0].mxu0
        %v652 = vadd.f32 %v316, %v651
        %v653 = vpop.f32.mrb[0].mxu0
        %654 = vmatprep.mubr.f32.mxu0 0.0
        %655 = vmatmul.mubr.f32.gmra.mrb[0].mxu0 %v365
        %v656 = vpop.f32.mrb[0].mxu0
        %v657 = vadd.f32 %v316, %v656
        %v658 = vpop.f32.mrb[0].mxu0
        %659 = vmatprep.mubr.f32.mxu0 0.0
        %660 = vmatmul.mubr.f32.gmra.mrb[0].mxu0 %v368
        %v661 = vpop.f32.mrb[0].mxu0
        %v662 = vadd.f32 %v316, %v661
        %v663 = vpop.f32.mrb[0].mxu0
        %664 = vmatprep.mubr.f32.mxu0 0.0
        %665 = vmatmul.mubr.f32.gmra.mrb[0].mxu0 %v371
        %v666 = vpop.f32.mrb[0].mxu0
        %v667 = vadd.f32 %v316, %v666
        %v668 = vpop.f32.mrb[0].mxu0
        %669 = vmatprep.mubr.f32.mxu0 0.0
        %670 = vmatmul.mubr.f32.gmra.mrb[0].mxu0 %v374
        %v671 = vpop.f32.mrb[0].mxu0
        %v672 = vadd.f32 %v316, %v671
        %v673 = vpop.f32.mrb[0].mxu0
        %674 = vmatprep.mubr.f32.mxu0 0.0
        %675 = vmatmul.mubr.f32.gmra.mrb[0].mxu0 %v377
        %v676 = vpop.f32.mrb[0].mxu0
        %v677 = vadd.f32 %v316, %v676
        %v678 = vpop.f32.mrb[0].mxu0
        %679 = vmatprep.mubr.f32.mxu0 0.0
        %680 = vmatmul.mubr.f32.gmra.mrb[0].mxu0 %v380
        %v681 = vpop.f32.mrb[0].mxu0
        %v682 = vadd.f32 %v316, %v681
        %v683 = vpop.f32.mrb[0].mxu0
        %684 = vmatprep.mubr.f32.mxu0 0.0
        %685 = vmatmul.mubr.f32.gmra.mrb[0].mxu0 %v383
        %v686 = vpop.f32.mrb[0].mxu0
        %v687 = vadd.f32 %v316, %v686
        %v688 = vpop.f32.mrb[0].mxu0
        %689 = vmatprep.mubr.f32.mxu0 0.0
        %690 = vmatmul.mubr.f32.gmra.mrb[0].mxu0 %v386
        %v691 = vpop.f32.mrb[0].mxu0
        %v692 = vadd.f32 %v316, %v691
        %v693 = vpop.f32.mrb[0].mxu0
        %694 = vmatprep.mubr.f32.mxu0 0.0
        %695 = vmatmul.mubr.f32.gmra.mrb[0].mxu0 %v389
        %v696 = vpop.f32.mrb[0].mxu0
        %v697 = vadd.f32 %v316, %v696
        %v698 = vpop.f32.mrb[0].mxu0
        %699 = vmatprep.mubr.f32.mxu0 0.0
        %700 = vmatmul.mubr.f32.gmra.mrb[0].mxu0 %v392
        %v701 = vpop.f32.mrb[0].mxu0
        %v702 = vadd.f32 %v316, %v701
        %v703 = vpop.f32.mrb[0].mxu0
        %704 = vmatprep.mubr.f32.mxu0 0.0
        %705 = vmatmul.mubr.f32.gmra.mrb[0].mxu0 %v395
        %v706 = vpop.f32.mrb[0].mxu0
        %v707 = vadd.f32 %v316, %v706
        %v708 = vpop.f32.mrb[0].mxu0
        %709 = vmatprep.mubr.f32.mxu0 0.0
        %710 = vmatmul.mubr.f32.gmra.mrb[0].mxu0 %v398
        %v711 = vpop.f32.mrb[0].mxu0
        %v712 = vadd.f32 %v316, %v711
        %v713 = vpop.f32.mrb[0].mxu0
        %714 = vmatprep.mubr.f32.mxu0 0.0
        %715 = vmatmul.mubr.f32.gmra.mrb[0].mxu0 %v401
        %v716 = vpop.f32.mrb[0].mxu0
        %v717 = vadd.f32 %v316, %v716
        %v718 = vpop.f32.mrb[0].mxu0
        %719 = vmatprep.mubr.f32.mxu0 0.0
        %720 = vmatmul.mubr.f32.gmra.mrb[0].mxu0 %v404
        %v721 = vpop.f32.mrb[0].mxu0
        %v722 = vadd.f32 %v316, %v721
        %v723 = vpop.f32.mrb[0].mxu0
        %724 = vmatprep.mubr.f32.mxu0 0.0
        %725 = vmatmul.mubr.f32.gmra.mrb[0].mxu0 %v407
        %v726 = vpop.f32.mrb[0].mxu0
        %v727 = vadd.f32 %v316, %v726
        %v728 = vpop.f32.mrb[0].mxu0
        %729 = vmatprep.mubr.f32.mxu0 0.0
        %730 = vmatmul.mubr.f32.gmra.mrb[0].mxu0 %v410
        %v731 = vpop.f32.mrb[0].mxu0
        %v732 = vadd.f32 %v316, %v731
        %v733 = vpop.f32.mrb[0].mxu0
        %734 = vmatprep.mubr.f32.mxu0 0.0
        %735 = vmatmul.mubr.f32.gmra.mrb[0].mxu0 %v413
        %v736 = vpop.f32.mrb[0].mxu0
        %v737 = vadd.f32 %v316, %v736
        %v738 = vpop.f32.mrb[0].mxu0
        %739 = vmatprep.mubr.f32.mxu0 0.0
        %740 = vmatmul.mubr.f32.gmra.mrb[0].mxu0 %v416
        %v741 = vpop.f32.mrb[0].mxu0
        %v742 = vadd.f32 %v316, %v741
        %v743 = vpop.f32.mrb[0].mxu0
        %744 = vmatprep.mubr.f32.mxu0 0.0
        %745 = vmatmul.mubr.f32.gmra.mrb[0].mxu0 %v419
        %v746 = vpop.f32.mrb[0].mxu0
        %v747 = vadd.f32 %v316, %v746
        %v748 = vpop.f32.mrb[0].mxu0
        %749 = vmatprep.mubr.f32.mxu0 0.0
        %750 = vmatmul.mubr.f32.gmra.mrb[0].mxu0 %v422
        %v751 = vpop.f32.mrb[0].mxu0
        %v752 = vadd.f32 %v316, %v751
        %v753 = vpop.f32.mrb[0].mxu0
        %754 = vmatprep.mubr.f32.mxu0 0.0
        %755 = vmatmul.mubr.f32.gmra.mrb[0].mxu0 %v425
        %v756 = vpop.f32.mrb[0].mxu0
        %v757 = vadd.f32 %v316, %v756
        %v758 = vpop.f32.mrb[0].mxu0
        %759 = vmatprep.mubr.f32.mxu0 0.0
        %760 = vmatmul.mubr.f32.gmra.mrb[0].mxu0 %v428
        %v761 = vpop.f32.mrb[0].mxu0
        %v762 = vadd.f32 %v316, %v761
        %v763 = vpop.f32.mrb[0].mxu0
        %764 = vmatprep.mubr.f32.mxu0 0.0
        %765 = vmatmul.mubr.f32.gmra.mrb[0].mxu0 %v431
        %v766 = vpop.f32.mrb[0].mxu0
        %v767 = vadd.f32 %v316, %v766
        %v768 = vpop.f32.mrb[0].mxu0
        %769 = vmatprep.mubr.f32.mxu0 0.0
        %770 = vmatmul.mubr.f32.gmra.mrb[0].mxu0 %v434
        %v771 = vpop.f32.mrb[0].mxu0
        %v772 = vadd.f32 %v316, %v771
        %v773 = vpop.f32.mrb[0].mxu0
        %774 = vmatprep.mubr.f32.mxu0 0.0
        %775 = vmatmul.mubr.f32.gmra.mrb[0].mxu0 %v437
        %v776 = vpop.f32.mrb[0].mxu0
        %v777 = vadd.f32 %v316, %v776
        %v778 = vpop.f32.mrb[0].mxu0
        %779 = vmatprep.mubr.f32.mxu0 0.0
        %780 = vmatmul.mubr.f32.gmra.mrb[0].mxu0 %v440
        %v781 = vpop.f32.mrb[0].mxu0
        %v782 = vadd.f32 %v316, %v781
        %v783 = vpop.f32.mrb[0].mxu0
        %784 = vmatprep.mubr.f32.mxu0 0.0
        %785 = vmatmul.mubr.f32.gmra.mrb[0].mxu0 %v443
        %v786 = vpop.f32.mrb[0].mxu0
        %v787 = vadd.f32 %v316, %v786
        %v788 = vpop.f32.mrb[0].mxu0
        %789 = vmatprep.mubr.f32.mxu0 0.0
        %790 = vmatmul.mubr.f32.gmra.mrb[0].mxu0 %v446
        %v791 = vpop.f32.mrb[0].mxu0
        %v792 = vadd.f32 %v316, %v791
        %v793 = vpop.f32.mrb[0].mxu0
        %794 = vmatprep.mubr.f32.mxu0 0.0
        %795 = vmatmul.mubr.f32.gmra.mrb[0].mxu0 %v449
        %v796 = vpop.f32.mrb[0].mxu0
        %v797 = vadd.f32 %v316, %v796
        %v798 = vpop.f32.mrb[0].mxu0
        %799 = vmatprep.mubr.f32.mxu0 0.0
        %800 = vmatmul.mubr.f32.gmra.mrb[0].mxu0 %v452
        %v801 = vpop.f32.mrb[0].mxu0
        %v802 = vadd.f32 %v316, %v801
        %v803 = vpop.f32.mrb[0].mxu0
        %804 = vmatprep.mubr.f32.mxu0 0.0
        %805 = vmatmul.mubr.f32.gmra.mrb[0].mxu0 %v455
        %v806 = vpop.f32.mrb[0].mxu0
        %v807 = vadd.f32 %v316, %v806
        %v808 = vpop.f32.mrb[0].mxu0
        %809 = vmatprep.mubr.f32.mxu0 0.0
        %810 = vmatmul.mubr.f32.gmra.mrb[0].mxu0 %v458
        %v811 = vpop.f32.mrb[0].mxu0
        %v812 = vadd.f32 %v316, %v811
        %v813 = vpop.f32.mrb[0].mxu0
        %814 = vmatprep.mubr.f32.mxu0 0.0
        %815 = vmatmul.mubr.f32.gmra.mrb[0].mxu0 %v461
        %v816 = vpop.f32.mrb[0].mxu0
        %v817 = vadd.f32 %v316, %v816
        %v818 = vpop.f32.mrb[0].mxu0
        %819 = vmatprep.mubr.f32.mxu0 0.0
        %820 = vmatmul.mubr.f32.gmra.mrb[0].mxu0 %v464
        %v821 = vpop.f32.mrb[0].mxu0
        %v822 = vadd.f32 %v316, %v821
        %v823 = vpop.f32.mrb[0].mxu0
        %824 = vmatprep.mubr.f32.mxu0 0.0
        %825 = vmatmul.mubr.f32.gmra.mrb[0].mxu0 %v467
        %v826 = vpop.f32.mrb[0].mxu0
        %v827 = vadd.f32 %v316, %v826
        %v828 = vpop.f32.mrb[0].mxu0
        %829 = vmatprep.mubr.f32.mxu0 0.0
        %830 = vmatmul.mubr.f32.gmra.mrb[0].mxu0 %v470
        %v831 = vpop.f32.mrb[0].mxu0
        %v832 = vadd.f32 %v316, %v831
        %v833 = vpop.f32.mrb[0].mxu0
        %834 = vmatprep.mubr.f32.mxu0 0.0
        %835 = vmatmul.mubr.f32.gmra.mrb[0].mxu0 %v473
        %v836 = vpop.f32.mrb[0].mxu0
        %v837 = vadd.f32 %v316, %v836
        %v838 = vpop.f32.mrb[0].mxu0
        %839 = vmatprep.mubr.f32.mxu0 0.0
        %840 = vmatmul.mubr.f32.gmra.mrb[0].mxu0 %v476
        %v841 = vpop.f32.mrb[0].mxu0
        %v842 = vadd.f32 %v316, %v841
        %v843 = vpop.f32.mrb[0].mxu0
        %844 = vmatprep.mubr.f32.mxu0 0.0
        %845 = vmatmul.mubr.f32.gmra.mrb[0].mxu0 %v479
        %v846 = vpop.f32.mrb[0].mxu0
        %v847 = vadd.f32 %v316, %v846
        %v848 = vpop.f32.mrb[0].mxu0
        %849 = vmatprep.mubr.f32.mxu0 0.0
        %850 = vmatmul.mubr.f32.gmra.mrb[0].mxu0 %v482
        %v851 = vpop.f32.mrb[0].mxu0
        %v852 = vadd.f32 %v316, %v851
        %v853 = vpop.f32.mrb[0].mxu0
        %854 = vmatprep.mubr.f32.mxu0 0.0
        %855 = vmatmul.mubr.f32.gmra.mrb[0].mxu0 %v485
        %v856 = vpop.f32.mrb[0].mxu0
        %v857 = vadd.f32 %v316, %v856
        %v858 = vpop.f32.mrb[0].mxu0
        %859 = vmatprep.mubr.f32.mxu0 0.0
        %860 = vmatmul.mubr.f32.gmra.mrb[0].mxu0 %v488
        %v861 = vpop.f32.mrb[0].mxu0
        %v862 = vadd.f32 %v316, %v861
        %v863 = vpop.f32.mrb[0].mxu0
        %864 = vmatprep.mubr.f32.mxu0 0.0
        %865 = vmatmul.mubr.f32.gmra.mrb[0].mxu0 %v491
        %v866 = vpop.f32.mrb[0].mxu0
        %v867 = vadd.f32 %v316, %v866
        %v868 = vpop.f32.mrb[0].mxu0
        %869 = vmatprep.mubr.f32.mxu0 0.0
        %870 = vmatmul.mubr.f32.gmra.mrb[0].mxu0 %v494
        %v871 = vpop.f32.mrb[0].mxu0
        %v872 = vadd.f32 %v316, %v871
        %v873 = vpop.f32.mrb[0].mxu0
        %874 = vmatprep.mubr.f32.mxu0 0.0
        %875 = vmatmul.mubr.f32.gmra.mrb[0].mxu0 %v497
        %v876 = vpop.f32.mrb[0].mxu0
        %v877 = vadd.f32 %v316, %v876
        %v878 = vpop.f32.mrb[0].mxu0
        %879 = vmatprep.mubr.f32.mxu0 0.0
        %880 = vmatmul.mubr.f32.gmra.mrb[0].mxu0 %v500
        %v881 = vpop.f32.mrb[0].mxu0
        %v882 = vadd.f32 %v316, %v881
        %v883 = vpop.f32.mrb[0].mxu0
        %884 = vmatprep.mubr.f32.mxu0 0.0
        %885 = vmatmul.mubr.f32.gmra.mrb[0].mxu0 %v503
        %v886 = vpop.f32.mrb[0].mxu0
        %v887 = vadd.f32 %v316, %v886
        %v888 = vpop.f32.mrb[0].mxu0
        %889 = vmatprep.mubr.f32.mxu0 0.0
        %890 = vmatmul.mubr.f32.gmra.mrb[0].mxu0 %v506
        %v891 = vpop.f32.mrb[0].mxu0
        %v892 = vadd.f32 %v316, %v891
        %v893 = vpop.f32.mrb[0].mxu0
        %894 = vmatprep.mubr.f32.mxu0 0.0
        %895 = vmatmul.mubr.f32.gmra.mrb[0].mxu0 %v509
        %v896 = vpop.f32.mrb[0].mxu0
        %v897 = vadd.f32 %v316, %v896
        %v898 = vpop.f32.mrb[0].mxu0
        %899 = vdwg.mxu0
        %v900 = vmax.f32 %v582, 0.0
        %v901 = vmax.f32 %v587, 0.0
        %v902 = vmax.f32 %v592, 0.0
        %v903 = vmax.f32 %v597, 0.0
        %v904 = vmax.f32 %v602, 0.0
        %v905 = vmax.f32 %v607, 0.0
        %v906 = vmax.f32 %v612, 0.0
        %v907 = vmax.f32 %v617, 0.0
        %v908 = vmax.f32 %v622, 0.0
        %v909 = vmax.f32 %v627, 0.0
        %v910 = vmax.f32 %v632, 0.0
        %v911 = vmax.f32 %v637, 0.0
        %v912 = vmax.f32 %v642, 0.0
        %v913 = vmax.f32 %v647, 0.0
        %v914 = vmax.f32 %v652, 0.0
        %v915 = vmax.f32 %v657, 0.0
        %v916 = vmax.f32 %v662, 0.0
        %v917 = vmax.f32 %v667, 0.0
        %v918 = vmax.f32 %v672, 0.0
        %v919 = vmax.f32 %v677, 0.0
        %v920 = vmax.f32 %v682, 0.0
        %v921 = vmax.f32 %v687, 0.0
        %v922 = vmax.f32 %v692, 0.0
        %v923 = vmax.f32 %v697, 0.0
        %v924 = vmax.f32 %v702, 0.0
        %v925 = vmax.f32 %v707, 0.0
        %v926 = vmax.f32 %v712, 0.0
        %v927 = vmax.f32 %v717, 0.0
        %v928 = vmax.f32 %v722, 0.0
        %v929 = vmax.f32 %v727, 0.0
        %v930 = vmax.f32 %v732, 0.0
        %v931 = vmax.f32 %v737, 0.0
        %v932 = vmax.f32 %v742, 0.0
        %v933 = vmax.f32 %v747, 0.0
        %v934 = vmax.f32 %v752, 0.0
        %v935 = vmax.f32 %v757, 0.0
        %v936 = vmax.f32 %v762, 0.0
        %v937 = vmax.f32 %v767, 0.0
        %v938 = vmax.f32 %v772, 0.0
        %v939 = vmax.f32 %v777, 0.0
        %v940 = vmax.f32 %v782, 0.0
        %v941 = vmax.f32 %v787, 0.0
        %v942 = vmax.f32 %v792, 0.0
        %v943 = vmax.f32 %v797, 0.0
        %v944 = vmax.f32 %v802, 0.0
        %v945 = vmax.f32 %v807, 0.0
        %v946 = vmax.f32 %v812, 0.0
        %v947 = vmax.f32 %v817, 0.0
        %v948 = vmax.f32 %v822, 0.0
        %v949 = vmax.f32 %v827, 0.0
        %v950 = vmax.f32 %v832, 0.0
        %v951 = vmax.f32 %v837, 0.0
        %v952 = vmax.f32 %v842, 0.0
        %v953 = vmax.f32 %v847, 0.0
        %v954 = vmax.f32 %v852, 0.0
        %v955 = vmax.f32 %v857, 0.0
        %v956 = vmax.f32 %v862, 0.0
        %v957 = vmax.f32 %v867, 0.0
        %v958 = vmax.f32 %v872, 0.0
        %v959 = vmax.f32 %v877, 0.0
        %v960 = vmax.f32 %v882, 0.0
        %v961 = vmax.f32 %v887, 0.0
        %v962 = vmax.f32 %v892, 0.0
        %v963 = vmax.f32 %v897, 0.0
        %v964 = vld [vmem:[%s3] sm:$0xff]
        %v965 = vld [vmem:[%s3 + $0x8] sm:$0xff]
        %v966 = vld [vmem:[%s4] sm:$0x1]
        %v968 = vlaneseq
        %v969 = vshrl.u32 %v968, 7
        %v970 = vsub.s32 0, %v969
        %v971 = vrot.slane %v966, %v970
        %vm973 = vcmask 130048
        %v975 = vsel %vm973, %v900, 0
        %v978 = vsel %vm973, %v901, 0
        %v981 = vsel %vm973, %v902, 0
        %v984 = vsel %vm973, %v903, 0
        %v987 = vsel %vm973, %v904, 0
        %v990 = vsel %vm973, %v905, 0
        %v993 = vsel %vm973, %v906, 0
        %v996 = vsel %vm973, %v907, 0
        %v999 = vsel %vm973, %v908, 0
        %v1002 = vsel %vm973, %v909, 0
        %v1005 = vsel %vm973, %v910, 0
        %v1008 = vsel %vm973, %v911, 0
        %v1011 = vsel %vm973, %v912, 0
        %v1014 = vsel %vm973, %v913, 0
        %v1017 = vsel %vm973, %v914, 0
        %v1020 = vsel %vm973, %v915, 0
        %v1023 = vsel %vm973, %v916, 0
        %v1026 = vsel %vm973, %v917, 0
        %v1029 = vsel %vm973, %v918, 0
        %v1032 = vsel %vm973, %v919, 0
        %v1035 = vsel %vm973, %v920, 0
        %v1038 = vsel %vm973, %v921, 0
        %v1041 = vsel %vm973, %v922, 0
        %v1044 = vsel %vm973, %v923, 0
        %v1047 = vsel %vm973, %v924, 0
        %v1050 = vsel %vm973, %v925, 0
        %v1053 = vsel %vm973, %v926, 0
        %v1056 = vsel %vm973, %v927, 0
        %v1059 = vsel %vm973, %v928, 0
        %v1062 = vsel %vm973, %v929, 0
        %v1065 = vsel %vm973, %v930, 0
        %v1068 = vsel %vm973, %v931, 0
        %v1071 = vsel %vm973, %v932, 0
        %v1074 = vsel %vm973, %v933, 0
        %v1077 = vsel %vm973, %v934, 0
        %v1080 = vsel %vm973, %v935, 0
        %v1083 = vsel %vm973, %v936, 0
        %v1086 = vsel %vm973, %v937, 0
        %v1089 = vsel %vm973, %v938, 0
        %v1092 = vsel %vm973, %v939, 0
        %v1095 = vsel %vm973, %v940, 0
        %v1098 = vsel %vm973, %v941, 0
        %v1101 = vsel %vm973, %v942, 0
        %v1104 = vsel %vm973, %v943, 0
        %v1107 = vsel %vm973, %v944, 0
        %v1110 = vsel %vm973, %v945, 0
        %v1113 = vsel %vm973, %v946, 0
        %v1116 = vsel %vm973, %v947, 0
        %v1119 = vsel %vm973, %v948, 0
        %v1122 = vsel %vm973, %v949, 0
        %v1125 = vsel %vm973, %v950, 0
        %v1128 = vsel %vm973, %v951, 0
        %v1131 = vsel %vm973, %v952, 0
        %v1134 = vsel %vm973, %v953, 0
        %v1137 = vsel %vm973, %v954, 0
        %v1140 = vsel %vm973, %v955, 0
        %v1143 = vsel %vm973, %v956, 0
        %v1146 = vsel %vm973, %v957, 0
        %v1149 = vsel %vm973, %v958, 0
        %v1152 = vsel %vm973, %v959, 0
        %v1155 = vsel %vm973, %v960, 0
        %v1158 = vsel %vm973, %v961, 0
        %v1161 = vsel %vm973, %v962, 0
        %v1164 = vsel %vm973, %v963, 0
        %1166 = vmatprep.subr.mxu0 0.0
        %1167 = vmatpush1.msra.mxu0 %v964
        %1168 = vmatprep.subr.mxu0 0.0
        %1169 = vmatpush1.msra.mxu0 %v965
        %1170 = vmatprep.subr.mxu0 0.0
        %1171 = vmatpush1.msra.mxu0 0.0
        %1172 = vmatprep.subr.mxu0 0.0
        %1173 = vmatpush1.msra.mxu0 0.0
        %1174 = vmatprep.subr.mxu0 0.0
        %1175 = vmatpush1.msra.mxu0 0.0
        %1176 = vmatprep.subr.mxu0 0.0
        %1177 = vmatpush1.msra.mxu0 0.0
        %1178 = vmatprep.subr.mxu0 0.0
        %1179 = vmatpush1.msra.mxu0 0.0
        %1180 = vmatprep.subr.mxu0 0.0
        %1181 = vmatpush1.msra.mxu0 0.0
        %1182 = vmatprep.subr.mxu0 0.0
        %1183 = vmatpush1.msra.mxu0 0.0
        %1184 = vmatprep.subr.mxu0 0.0
        %1185 = vmatpush1.msra.mxu0 0.0
        %1186 = vmatprep.subr.mxu0 0.0
        %1187 = vmatpush1.msra.mxu0 0.0
        %1188 = vmatprep.subr.mxu0 0.0
        %1189 = vmatpush1.msra.mxu0 0.0
        %1190 = vmatprep.subr.mxu0 0.0
        %1191 = vmatpush1.msra.mxu0 0.0
        %1192 = vmatprep.subr.mxu0 0.0
        %1193 = vmatpush1.msra.mxu0 0.0
        %1194 = vmatprep.subr.mxu0 0.0
        %1195 = vmatpush1.msra.mxu0 0.0
        %1196 = vmatprep.subr.mxu0 0.0
        %1197 = vmatpush1.msra.mxu0 0.0
        %1198 = vmatprep.subr.mxu0 0.0
        %1199 = vmatpush1.msra.mxu0 0.0
        %1200 = vmatprep.subr.mxu0 0.0
        %1201 = vmatpush1.msra.mxu0 0.0
        %1202 = vmatprep.subr.mxu0 0.0
        %1203 = vmatpush1.msra.mxu0 0.0
        %1204 = vmatprep.subr.mxu0 0.0
        %1205 = vmatpush1.msra.mxu0 0.0
        %1206 = vmatprep.subr.mxu0 0.0
        %1207 = vmatpush1.msra.mxu0 0.0
        %1208 = vmatprep.subr.mxu0 0.0
        %1209 = vmatpush1.msra.mxu0 0.0
        %1210 = vmatprep.subr.mxu0 0.0
        %1211 = vmatpush1.msra.mxu0 0.0
        %1212 = vmatprep.subr.mxu0 0.0
        %1213 = vmatpush1.msra.mxu0 0.0
        %1214 = vmatprep.subr.mxu0 0.0
        %1215 = vmatpush1.msra.mxu0 0.0
        %1216 = vmatprep.subr.mxu0 0.0
        %1217 = vmatpush1.msra.mxu0 0.0
        %1218 = vmatprep.subr.mxu0 0.0
        %1219 = vmatpush1.msra.mxu0 0.0
        %1220 = vmatprep.subr.mxu0 0.0
        %1221 = vmatpush1.msra.mxu0 0.0
        %1222 = vmatprep.subr.mxu0 0.0
        %1223 = vmatpush1.msra.mxu0 0.0
        %1224 = vmatprep.subr.mxu0 0.0
        %1225 = vmatpush1.msra.mxu0 0.0
        %1226 = vmatprep.subr.mxu0 0.0
        %1227 = vmatpush1.msra.mxu0 0.0
        %1228 = vmatprep.subr.mxu0 0.0
        %1229 = vmatpush1.msra.mxu0 0.0
        %1230 = vmatprep.mubr.f32.mxu0 0.0
        %1231 = vmatmul.mubr.f32.gmra.mrb[0].mxu0 %v975
        %v1232 = vpop.f32.mrb[0].mxu0
        %v1233 = vadd.f32 %v971, %v1232
        %v1234 = vpop.f32.mrb[0].mxu0
        %1235 = vmatprep.mubr.f32.mxu0 0.0
        %1236 = vmatmul.mubr.f32.gmra.mrb[0].mxu0 %v978
        %v1237 = vpop.f32.mrb[0].mxu0
        %v1238 = vadd.f32 %v971, %v1237
        %v1239 = vpop.f32.mrb[0].mxu0
        %1240 = vmatprep.mubr.f32.mxu0 0.0
        %1241 = vmatmul.mubr.f32.gmra.mrb[0].mxu0 %v981
        %v1242 = vpop.f32.mrb[0].mxu0
        %v1243 = vadd.f32 %v971, %v1242
        %v1244 = vpop.f32.mrb[0].mxu0
        %1245 = vmatprep.mubr.f32.mxu0 0.0
        %1246 = vmatmul.mubr.f32.gmra.mrb[0].mxu0 %v984
        %v1247 = vpop.f32.mrb[0].mxu0
        %v1248 = vadd.f32 %v971, %v1247
        %v1249 = vpop.f32.mrb[0].mxu0
        %1250 = vmatprep.mubr.f32.mxu0 0.0
        %1251 = vmatmul.mubr.f32.gmra.mrb[0].mxu0 %v987
        %v1252 = vpop.f32.mrb[0].mxu0
        %v1253 = vadd.f32 %v971, %v1252
        %v1254 = vpop.f32.mrb[0].mxu0
        %1255 = vmatprep.mubr.f32.mxu0 0.0
        %1256 = vmatmul.mubr.f32.gmra.mrb[0].mxu0 %v990
        %v1257 = vpop.f32.mrb[0].mxu0
        %v1258 = vadd.f32 %v971, %v1257
        %v1259 = vpop.f32.mrb[0].mxu0
        %1260 = vmatprep.mubr.f32.mxu0 0.0
        %1261 = vmatmul.mubr.f32.gmra.mrb[0].mxu0 %v993
        %v1262 = vpop.f32.mrb[0].mxu0
        %v1263 = vadd.f32 %v971, %v1262
        %v1264 = vpop.f32.mrb[0].mxu0
        %1265 = vmatprep.mubr.f32.mxu0 0.0
        %1266 = vmatmul.mubr.f32.gmra.mrb[0].mxu0 %v996
        %v1267 = vpop.f32.mrb[0].mxu0
        %v1268 = vadd.f32 %v971, %v1267
        %v1269 = vpop.f32.mrb[0].mxu0
        %1270 = vmatprep.mubr.f32.mxu0 0.0
        %1271 = vmatmul.mubr.f32.gmra.mrb[0].mxu0 %v999
        %v1272 = vpop.f32.mrb[0].mxu0
        %v1273 = vadd.f32 %v971, %v1272
        %v1274 = vpop.f32.mrb[0].mxu0
        %1275 = vmatprep.mubr.f32.mxu0 0.0
        %1276 = vmatmul.mubr.f32.gmra.mrb[0].mxu0 %v1002
        %v1277 = vpop.f32.mrb[0].mxu0
        %v1278 = vadd.f32 %v971, %v1277
        %v1279 = vpop.f32.mrb[0].mxu0
        %1280 = vmatprep.mubr.f32.mxu0 0.0
        %1281 = vmatmul.mubr.f32.gmra.mrb[0].mxu0 %v1005
        %v1282 = vpop.f32.mrb[0].mxu0
        %v1283 = vadd.f32 %v971, %v1282
        %v1284 = vpop.f32.mrb[0].mxu0
        %1285 = vmatprep.mubr.f32.mxu0 0.0
        %1286 = vmatmul.mubr.f32.gmra.mrb[0].mxu0 %v1008
        %v1287 = vpop.f32.mrb[0].mxu0
        %v1288 = vadd.f32 %v971, %v1287
        %v1289 = vpop.f32.mrb[0].mxu0
        %1290 = vmatprep.mubr.f32.mxu0 0.0
        %1291 = vmatmul.mubr.f32.gmra.mrb[0].mxu0 %v1011
        %v1292 = vpop.f32.mrb[0].mxu0
        %v1293 = vadd.f32 %v971, %v1292
        %v1294 = vpop.f32.mrb[0].mxu0
        %1295 = vmatprep.mubr.f32.mxu0 0.0
        %1296 = vmatmul.mubr.f32.gmra.mrb[0].mxu0 %v1014
        %v1297 = vpop.f32.mrb[0].mxu0
        %v1298 = vadd.f32 %v971, %v1297
        %v1299 = vpop.f32.mrb[0].mxu0
        %1300 = vmatprep.mubr.f32.mxu0 0.0
        %1301 = vmatmul.mubr.f32.gmra.mrb[0].mxu0 %v1017
        %v1302 = vpop.f32.mrb[0].mxu0
        %v1303 = vadd.f32 %v971, %v1302
        %v1304 = vpop.f32.mrb[0].mxu0
        %1305 = vmatprep.mubr.f32.mxu0 0.0
        %1306 = vmatmul.mubr.f32.gmra.mrb[0].mxu0 %v1020
        %v1307 = vpop.f32.mrb[0].mxu0
        %v1308 = vadd.f32 %v971, %v1307
        %v1309 = vpop.f32.mrb[0].mxu0
        %1310 = vmatprep.mubr.f32.mxu0 0.0
        %1311 = vmatmul.mubr.f32.gmra.mrb[0].mxu0 %v1023
        %v1312 = vpop.f32.mrb[0].mxu0
        %v1313 = vadd.f32 %v971, %v1312
        %v1314 = vpop.f32.mrb[0].mxu0
        %1315 = vmatprep.mubr.f32.mxu0 0.0
        %1316 = vmatmul.mubr.f32.gmra.mrb[0].mxu0 %v1026
        %v1317 = vpop.f32.mrb[0].mxu0
        %v1318 = vadd.f32 %v971, %v1317
        %v1319 = vpop.f32.mrb[0].mxu0
        %1320 = vmatprep.mubr.f32.mxu0 0.0
        %1321 = vmatmul.mubr.f32.gmra.mrb[0].mxu0 %v1029
        %v1322 = vpop.f32.mrb[0].mxu0
        %v1323 = vadd.f32 %v971, %v1322
        %v1324 = vpop.f32.mrb[0].mxu0
        %1325 = vmatprep.mubr.f32.mxu0 0.0
        %1326 = vmatmul.mubr.f32.gmra.mrb[0].mxu0 %v1032
        %v1327 = vpop.f32.mrb[0].mxu0
        %v1328 = vadd.f32 %v971, %v1327
        %v1329 = vpop.f32.mrb[0].mxu0
        %1330 = vmatprep.mubr.f32.mxu0 0.0
        %1331 = vmatmul.mubr.f32.gmra.mrb[0].mxu0 %v1035
        %v1332 = vpop.f32.mrb[0].mxu0
        %v1333 = vadd.f32 %v971, %v1332
        %v1334 = vpop.f32.mrb[0].mxu0
        %1335 = vmatprep.mubr.f32.mxu0 0.0
        %1336 = vmatmul.mubr.f32.gmra.mrb[0].mxu0 %v1038
        %v1337 = vpop.f32.mrb[0].mxu0
        %v1338 = vadd.f32 %v971, %v1337
        %v1339 = vpop.f32.mrb[0].mxu0
        %1340 = vmatprep.mubr.f32.mxu0 0.0
        %1341 = vmatmul.mubr.f32.gmra.mrb[0].mxu0 %v1041
        %v1342 = vpop.f32.mrb[0].mxu0
        %v1343 = vadd.f32 %v971, %v1342
        %v1344 = vpop.f32.mrb[0].mxu0
        %1345 = vmatprep.mubr.f32.mxu0 0.0
        %1346 = vmatmul.mubr.f32.gmra.mrb[0].mxu0 %v1044
        %v1347 = vpop.f32.mrb[0].mxu0
        %v1348 = vadd.f32 %v971, %v1347
        %v1349 = vpop.f32.mrb[0].mxu0
        %1350 = vmatprep.mubr.f32.mxu0 0.0
        %1351 = vmatmul.mubr.f32.gmra.mrb[0].mxu0 %v1047
        %v1352 = vpop.f32.mrb[0].mxu0
        %v1353 = vadd.f32 %v971, %v1352
        %v1354 = vpop.f32.mrb[0].mxu0
        %1355 = vmatprep.mubr.f32.mxu0 0.0
        %1356 = vmatmul.mubr.f32.gmra.mrb[0].mxu0 %v1050
        %v1357 = vpop.f32.mrb[0].mxu0
        %v1358 = vadd.f32 %v971, %v1357
        %v1359 = vpop.f32.mrb[0].mxu0
        %1360 = vmatprep.mubr.f32.mxu0 0.0
        %1361 = vmatmul.mubr.f32.gmra.mrb[0].mxu0 %v1053
        %v1362 = vpop.f32.mrb[0].mxu0
        %v1363 = vadd.f32 %v971, %v1362
        %v1364 = vpop.f32.mrb[0].mxu0
        %1365 = vmatprep.mubr.f32.mxu0 0.0
        %1366 = vmatmul.mubr.f32.gmra.mrb[0].mxu0 %v1056
        %v1367 = vpop.f32.mrb[0].mxu0
        %v1368 = vadd.f32 %v971, %v1367
        %v1369 = vpop.f32.mrb[0].mxu0
        %1370 = vmatprep.mubr.f32.mxu0 0.0
        %1371 = vmatmul.mubr.f32.gmra.mrb[0].mxu0 %v1059
        %v1372 = vpop.f32.mrb[0].mxu0
        %v1373 = vadd.f32 %v971, %v1372
        %v1374 = vpop.f32.mrb[0].mxu0
        %1375 = vmatprep.mubr.f32.mxu0 0.0
        %1376 = vmatmul.mubr.f32.gmra.mrb[0].mxu0 %v1062
        %v1377 = vpop.f32.mrb[0].mxu0
        %v1378 = vadd.f32 %v971, %v1377
        %v1379 = vpop.f32.mrb[0].mxu0
        %1380 = vmatprep.mubr.f32.mxu0 0.0
        %1381 = vmatmul.mubr.f32.gmra.mrb[0].mxu0 %v1065
        %v1382 = vpop.f32.mrb[0].mxu0
        %v1383 = vadd.f32 %v971, %v1382
        %v1384 = vpop.f32.mrb[0].mxu0
        %1385 = vmatprep.mubr.f32.mxu0 0.0
        %1386 = vmatmul.mubr.f32.gmra.mrb[0].mxu0 %v1068
        %v1387 = vpop.f32.mrb[0].mxu0
        %v1388 = vadd.f32 %v971, %v1387
        %v1389 = vpop.f32.mrb[0].mxu0
        %1390 = vmatprep.mubr.f32.mxu0 0.0
        %1391 = vmatmul.mubr.f32.gmra.mrb[0].mxu0 %v1071
        %v1392 = vpop.f32.mrb[0].mxu0
        %v1393 = vadd.f32 %v971, %v1392
        %v1394 = vpop.f32.mrb[0].mxu0
        %1395 = vmatprep.mubr.f32.mxu0 0.0
        %1396 = vmatmul.mubr.f32.gmra.mrb[0].mxu0 %v1074
        %v1397 = vpop.f32.mrb[0].mxu0
        %v1398 = vadd.f32 %v971, %v1397
        %v1399 = vpop.f32.mrb[0].mxu0
        %1400 = vmatprep.mubr.f32.mxu0 0.0
        %1401 = vmatmul.mubr.f32.gmra.mrb[0].mxu0 %v1077
        %v1402 = vpop.f32.mrb[0].mxu0
        %v1403 = vadd.f32 %v971, %v1402
        %v1404 = vpop.f32.mrb[0].mxu0
        %1405 = vmatprep.mubr.f32.mxu0 0.0
        %1406 = vmatmul.mubr.f32.gmra.mrb[0].mxu0 %v1080
        %v1407 = vpop.f32.mrb[0].mxu0
        %v1408 = vadd.f32 %v971, %v1407
        %v1409 = vpop.f32.mrb[0].mxu0
        %1410 = vmatprep.mubr.f32.mxu0 0.0
        %1411 = vmatmul.mubr.f32.gmra.mrb[0].mxu0 %v1083
        %v1412 = vpop.f32.mrb[0].mxu0
        %v1413 = vadd.f32 %v971, %v1412
        %v1414 = vpop.f32.mrb[0].mxu0
        %1415 = vmatprep.mubr.f32.mxu0 0.0
        %1416 = vmatmul.mubr.f32.gmra.mrb[0].mxu0 %v1086
        %v1417 = vpop.f32.mrb[0].mxu0
        %v1418 = vadd.f32 %v971, %v1417
        %v1419 = vpop.f32.mrb[0].mxu0
        %1420 = vmatprep.mubr.f32.mxu0 0.0
        %1421 = vmatmul.mubr.f32.gmra.mrb[0].mxu0 %v1089
        %v1422 = vpop.f32.mrb[0].mxu0
        %v1423 = vadd.f32 %v971, %v1422
        %v1424 = vpop.f32.mrb[0].mxu0
        %1425 = vmatprep.mubr.f32.mxu0 0.0
        %1426 = vmatmul.mubr.f32.gmra.mrb[0].mxu0 %v1092
        %v1427 = vpop.f32.mrb[0].mxu0
        %v1428 = vadd.f32 %v971, %v1427
        %v1429 = vpop.f32.mrb[0].mxu0
        %1430 = vmatprep.mubr.f32.mxu0 0.0
        %1431 = vmatmul.mubr.f32.gmra.mrb[0].mxu0 %v1095
        %v1432 = vpop.f32.mrb[0].mxu0
        %v1433 = vadd.f32 %v971, %v1432
        %v1434 = vpop.f32.mrb[0].mxu0
        %1435 = vmatprep.mubr.f32.mxu0 0.0
        %1436 = vmatmul.mubr.f32.gmra.mrb[0].mxu0 %v1098
        %v1437 = vpop.f32.mrb[0].mxu0
        %v1438 = vadd.f32 %v971, %v1437
        %v1439 = vpop.f32.mrb[0].mxu0
        %1440 = vmatprep.mubr.f32.mxu0 0.0
        %1441 = vmatmul.mubr.f32.gmra.mrb[0].mxu0 %v1101
        %v1442 = vpop.f32.mrb[0].mxu0
        %v1443 = vadd.f32 %v971, %v1442
        %v1444 = vpop.f32.mrb[0].mxu0
        %1445 = vmatprep.mubr.f32.mxu0 0.0
        %1446 = vmatmul.mubr.f32.gmra.mrb[0].mxu0 %v1104
        %v1447 = vpop.f32.mrb[0].mxu0
        %v1448 = vadd.f32 %v971, %v1447
        %v1449 = vpop.f32.mrb[0].mxu0
        %1450 = vmatprep.mubr.f32.mxu0 0.0
        %1451 = vmatmul.mubr.f32.gmra.mrb[0].mxu0 %v1107
        %v1452 = vpop.f32.mrb[0].mxu0
        %v1453 = vadd.f32 %v971, %v1452
        %v1454 = vpop.f32.mrb[0].mxu0
        %1455 = vmatprep.mubr.f32.mxu0 0.0
        %1456 = vmatmul.mubr.f32.gmra.mrb[0].mxu0 %v1110
        %v1457 = vpop.f32.mrb[0].mxu0
        %v1458 = vadd.f32 %v971, %v1457
        %v1459 = vpop.f32.mrb[0].mxu0
        %1460 = vmatprep.mubr.f32.mxu0 0.0
        %1461 = vmatmul.mubr.f32.gmra.mrb[0].mxu0 %v1113
        %v1462 = vpop.f32.mrb[0].mxu0
        %v1463 = vadd.f32 %v971, %v1462
        %v1464 = vpop.f32.mrb[0].mxu0
        %1465 = vmatprep.mubr.f32.mxu0 0.0
        %1466 = vmatmul.mubr.f32.gmra.mrb[0].mxu0 %v1116
        %v1467 = vpop.f32.mrb[0].mxu0
        %v1468 = vadd.f32 %v971, %v1467
        %v1469 = vpop.f32.mrb[0].mxu0
        %1470 = vmatprep.mubr.f32.mxu0 0.0
        %1471 = vmatmul.mubr.f32.gmra.mrb[0].mxu0 %v1119
        %v1472 = vpop.f32.mrb[0].mxu0
        %v1473 = vadd.f32 %v971, %v1472
        %v1474 = vpop.f32.mrb[0].mxu0
        %1475 = vmatprep.mubr.f32.mxu0 0.0
        %1476 = vmatmul.mubr.f32.gmra.mrb[0].mxu0 %v1122
        %v1477 = vpop.f32.mrb[0].mxu0
        %v1478 = vadd.f32 %v971, %v1477
        %v1479 = vpop.f32.mrb[0].mxu0
        %1480 = vmatprep.mubr.f32.mxu0 0.0
        %1481 = vmatmul.mubr.f32.gmra.mrb[0].mxu0 %v1125
        %v1482 = vpop.f32.mrb[0].mxu0
        %v1483 = vadd.f32 %v971, %v1482
        %v1484 = vpop.f32.mrb[0].mxu0
        %1485 = vmatprep.mubr.f32.mxu0 0.0
        %1486 = vmatmul.mubr.f32.gmra.mrb[0].mxu0 %v1128
        %v1487 = vpop.f32.mrb[0].mxu0
        %v1488 = vadd.f32 %v971, %v1487
        %v1489 = vpop.f32.mrb[0].mxu0
        %1490 = vmatprep.mubr.f32.mxu0 0.0
        %1491 = vmatmul.mubr.f32.gmra.mrb[0].mxu0 %v1131
        %v1492 = vpop.f32.mrb[0].mxu0
        %v1493 = vadd.f32 %v971, %v1492
        %v1494 = vpop.f32.mrb[0].mxu0
        %1495 = vmatprep.mubr.f32.mxu0 0.0
        %1496 = vmatmul.mubr.f32.gmra.mrb[0].mxu0 %v1134
        %v1497 = vpop.f32.mrb[0].mxu0
        %v1498 = vadd.f32 %v971, %v1497
        %v1499 = vpop.f32.mrb[0].mxu0
        %1500 = vmatprep.mubr.f32.mxu0 0.0
        %1501 = vmatmul.mubr.f32.gmra.mrb[0].mxu0 %v1137
        %v1502 = vpop.f32.mrb[0].mxu0
        %v1503 = vadd.f32 %v971, %v1502
        %v1504 = vpop.f32.mrb[0].mxu0
        %1505 = vmatprep.mubr.f32.mxu0 0.0
        %1506 = vmatmul.mubr.f32.gmra.mrb[0].mxu0 %v1140
        %v1507 = vpop.f32.mrb[0].mxu0
        %v1508 = vadd.f32 %v971, %v1507
        %v1509 = vpop.f32.mrb[0].mxu0
        %1510 = vmatprep.mubr.f32.mxu0 0.0
        %1511 = vmatmul.mubr.f32.gmra.mrb[0].mxu0 %v1143
        %v1512 = vpop.f32.mrb[0].mxu0
        %v1513 = vadd.f32 %v971, %v1512
        %v1514 = vpop.f32.mrb[0].mxu0
        %1515 = vmatprep.mubr.f32.mxu0 0.0
        %1516 = vmatmul.mubr.f32.gmra.mrb[0].mxu0 %v1146
        %v1517 = vpop.f32.mrb[0].mxu0
        %v1518 = vadd.f32 %v971, %v1517
        %v1519 = vpop.f32.mrb[0].mxu0
        %1520 = vmatprep.mubr.f32.mxu0 0.0
        %1521 = vmatmul.mubr.f32.gmra.mrb[0].mxu0 %v1149
        %v1522 = vpop.f32.mrb[0].mxu0
        %v1523 = vadd.f32 %v971, %v1522
        %v1524 = vpop.f32.mrb[0].mxu0
        %1525 = vmatprep.mubr.f32.mxu0 0.0
        %1526 = vmatmul.mubr.f32.gmra.mrb[0].mxu0 %v1152
        %v1527 = vpop.f32.mrb[0].mxu0
        %v1528 = vadd.f32 %v971, %v1527
        %v1529 = vpop.f32.mrb[0].mxu0
        %1530 = vmatprep.mubr.f32.mxu0 0.0
        %1531 = vmatmul.mubr.f32.gmra.mrb[0].mxu0 %v1155
        %v1532 = vpop.f32.mrb[0].mxu0
        %v1533 = vadd.f32 %v971, %v1532
        %v1534 = vpop.f32.mrb[0].mxu0
        %1535 = vmatprep.mubr.f32.mxu0 0.0
        %1536 = vmatmul.mubr.f32.gmra.mrb[0].mxu0 %v1158
        %v1537 = vpop.f32.mrb[0].mxu0
        %v1538 = vadd.f32 %v971, %v1537
        %v1539 = vpop.f32.mrb[0].mxu0
        %1540 = vmatprep.mubr.f32.mxu0 0.0
        %1541 = vmatmul.mubr.f32.gmra.mrb[0].mxu0 %v1161
        %v1542 = vpop.f32.mrb[0].mxu0
        %v1543 = vadd.f32 %v971, %v1542
        %v1544 = vpop.f32.mrb[0].mxu0
        %1545 = vmatprep.mubr.f32.mxu0 0.0
        %1546 = vmatmul.mubr.f32.gmra.mrb[0].mxu0 %v1164
        %v1547 = vpop.f32.mrb[0].mxu0
        %v1548 = vadd.f32 %v971, %v1547
        %v1549 = vpop.f32.mrb[0].mxu0
        %1550 = vdwg.mxu0
        %1551 = vst.msk [vmem:[%s226] sm:$0xff] %vm973, %v900
        %1552 = vst.msk [vmem:[%s226 + $0x8] sm:$0xff] %vm973, %v901
        %1553 = vst.msk [vmem:[%s226 + $0x10] sm:$0xff] %vm973, %v902
        %1554 = vst.msk [vmem:[%s226 + $0x18] sm:$0xff] %vm973, %v903
        %1555 = vst.msk [vmem:[%s226 + $0x20] sm:$0xff] %vm973, %v904
        %1556 = vst.msk [vmem:[%s226 + $0x28] sm:$0xff] %vm973, %v905
        %1557 = vst.msk [vmem:[%s226 + $0x30] sm:$0xff] %vm973, %v906
        %1558 = vst.msk [vmem:[%s226 + $0x38] sm:$0xff] %vm973, %v907
        %1559 = vst.msk [vmem:[%s226 + $0x40] sm:$0xff] %vm973, %v908
        %1560 = vst.msk [vmem:[%s226 + $0x48] sm:$0xff] %vm973, %v909
        %1561 = vst.msk [vmem:[%s226 + $0x50] sm:$0xff] %vm973, %v910
        %1562 = vst.msk [vmem:[%s226 + $0x58] sm:$0xff] %vm973, %v911
        %1563 = vst.msk [vmem:[%s226 + $0x60] sm:$0xff] %vm973, %v912
        %1564 = vst.msk [vmem:[%s226 + $0x68] sm:$0xff] %vm973, %v913
        %1565 = vst.msk [vmem:[%s226 + $0x70] sm:$0xff] %vm973, %v914
        %1566 = vst.msk [vmem:[%s226 + $0x78] sm:$0xff] %vm973, %v915
        %1567 = vst.msk [vmem:[%s226 + $0x80] sm:$0xff] %vm973, %v916
        %1568 = vst.msk [vmem:[%s226 + $0x88] sm:$0xff] %vm973, %v917
        %1569 = vst.msk [vmem:[%s226 + $0x90] sm:$0xff] %vm973, %v918
        %1570 = vst.msk [vmem:[%s226 + $0x98] sm:$0xff] %vm973, %v919
        %1571 = vst.msk [vmem:[%s226 + $0xa0] sm:$0xff] %vm973, %v920
        %1572 = vst.msk [vmem:[%s226 + $0xa8] sm:$0xff] %vm973, %v921
        %1573 = vst.msk [vmem:[%s226 + $0xb0] sm:$0xff] %vm973, %v922
        %1574 = vst.msk [vmem:[%s226 + $0xb8] sm:$0xff] %vm973, %v923
        %1575 = vst.msk [vmem:[%s226 + $0xc0] sm:$0xff] %vm973, %v924
        %1576 = vst.msk [vmem:[%s226 + $0xc8] sm:$0xff] %vm973, %v925
        %1577 = vst.msk [vmem:[%s226 + $0xd0] sm:$0xff] %vm973, %v926
        %1578 = vst.msk [vmem:[%s226 + $0xd8] sm:$0xff] %vm973, %v927
        %1579 = vst.msk [vmem:[%s226 + $0xe0] sm:$0xff] %vm973, %v928
        %1580 = vst.msk [vmem:[%s226 + $0xe8] sm:$0xff] %vm973, %v929
        %1581 = vst.msk [vmem:[%s226 + $0xf0] sm:$0xff] %vm973, %v930
        %1582 = vst.msk [vmem:[%s226 + $0xf8] sm:$0xff] %vm973, %v931
        %1583 = vst.msk [vmem:[%s226 + $0x100] sm:$0xff] %vm973, %v932
        %1584 = vst.msk [vmem:[%s226 + $0x108] sm:$0xff] %vm973, %v933
        %1585 = vst.msk [vmem:[%s226 + $0x110] sm:$0xff] %vm973, %v934
        %1586 = vst.msk [vmem:[%s226 + $0x118] sm:$0xff] %vm973, %v935
        %1587 = vst.msk [vmem:[%s226 + $0x120] sm:$0xff] %vm973, %v936
        %1588 = vst.msk [vmem:[%s226 + $0x128] sm:$0xff] %vm973, %v937
        %1589 = vst.msk [vmem:[%s226 + $0x130] sm:$0xff] %vm973, %v938
        %1590 = vst.msk [vmem:[%s226 + $0x138] sm:$0xff] %vm973, %v939
        %1591 = vst.msk [vmem:[%s226 + $0x140] sm:$0xff] %vm973, %v940
        %1592 = vst.msk [vmem:[%s226 + $0x148] sm:$0xff] %vm973, %v941
        %1593 = vst.msk [vmem:[%s226 + $0x150] sm:$0xff] %vm973, %v942
        %1594 = vst.msk [vmem:[%s226 + $0x158] sm:$0xff] %vm973, %v943
        %1595 = vst.msk [vmem:[%s226 + $0x160] sm:$0xff] %vm973, %v944
        %1596 = vst.msk [vmem:[%s226 + $0x168] sm:$0xff] %vm973, %v945
        %1597 = vst.msk [vmem:[%s226 + $0x170] sm:$0xff] %vm973, %v946
        %1598 = vst.msk [vmem:[%s226 + $0x178] sm:$0xff] %vm973, %v947
        %1599 = vst.msk [vmem:[%s226 + $0x180] sm:$0xff] %vm973, %v948
        %1600 = vst.msk [vmem:[%s226 + $0x188] sm:$0xff] %vm973, %v949
        %1601 = vst.msk [vmem:[%s226 + $0x190] sm:$0xff] %vm973, %v950
        %1602 = vst.msk [vmem:[%s226 + $0x198] sm:$0xff] %vm973, %v951
        %1603 = vst.msk [vmem:[%s226 + $0x1a0] sm:$0xff] %vm973, %v952
        %1604 = vst.msk [vmem:[%s226 + $0x1a8] sm:$0xff] %vm973, %v953
        %1605 = vst.msk [vmem:[%s226 + $0x1b0] sm:$0xff] %vm973, %v954
        %1606 = vst.msk [vmem:[%s226 + $0x1b8] sm:$0xff] %vm973, %v955
        %1607 = vst.msk [vmem:[%s226 + $0x1c0] sm:$0xff] %vm973, %v956
        %1608 = vst.msk [vmem:[%s226 + $0x1c8] sm:$0xff] %vm973, %v957
        %1609 = vst.msk [vmem:[%s226 + $0x1d0] sm:$0xff] %vm973, %v958
        %1610 = vst.msk [vmem:[%s226 + $0x1d8] sm:$0xff] %vm973, %v959
        %1611 = vst.msk [vmem:[%s226 + $0x1e0] sm:$0xff] %vm973, %v960
        %1612 = vst.msk [vmem:[%s226 + $0x1e8] sm:$0xff] %vm973, %v961
        %1613 = vst.msk [vmem:[%s226 + $0x1f0] sm:$0xff] %vm973, %v962
        %1614 = vst.msk [vmem:[%s226 + $0x1f8] sm:$0xff] %vm973, %v963
        %1679 = vrot.lane.b32.xlu0 %v1233, 16
        %v1680 = vpop.permute.xlu0 %1679
        %1681 = vrot.lane.b32.xlu0 %v1238, 16
        %v1682 = vpop.permute.xlu0 %1681
        %1683 = vrot.lane.b32.xlu0 %v1243, 16
        %v1684 = vpop.permute.xlu0 %1683
        %1685 = vrot.lane.b32.xlu0 %v1248, 16
        %v1686 = vpop.permute.xlu0 %1685
        %1687 = vrot.lane.b32.xlu0 %v1253, 16
        %v1688 = vpop.permute.xlu0 %1687
        %1689 = vrot.lane.b32.xlu0 %v1258, 16
        %v1690 = vpop.permute.xlu0 %1689
        %1691 = vrot.lane.b32.xlu0 %v1263, 16
        %v1692 = vpop.permute.xlu0 %1691
        %1693 = vrot.lane.b32.xlu0 %v1268, 16
        %v1694 = vpop.permute.xlu0 %1693
        %1695 = vrot.lane.b32.xlu0 %v1273, 16
        %v1696 = vpop.permute.xlu0 %1695
        %1697 = vrot.lane.b32.xlu0 %v1278, 16
        %v1698 = vpop.permute.xlu0 %1697
        %1699 = vrot.lane.b32.xlu0 %v1283, 16
        %v1700 = vpop.permute.xlu0 %1699
        %1701 = vrot.lane.b32.xlu0 %v1288, 16
        %v1702 = vpop.permute.xlu0 %1701
        %1703 = vrot.lane.b32.xlu0 %v1293, 16
        %v1704 = vpop.permute.xlu0 %1703
        %1705 = vrot.lane.b32.xlu0 %v1298, 16
        %v1706 = vpop.permute.xlu0 %1705
        %1707 = vrot.lane.b32.xlu0 %v1303, 16
        %v1708 = vpop.permute.xlu0 %1707
        %1709 = vrot.lane.b32.xlu0 %v1308, 16
        %v1710 = vpop.permute.xlu0 %1709
        %1711 = vrot.lane.b32.xlu0 %v1313, 16
        %v1712 = vpop.permute.xlu0 %1711
        %1713 = vrot.lane.b32.xlu0 %v1318, 16
        %v1714 = vpop.permute.xlu0 %1713
        %1715 = vrot.lane.b32.xlu0 %v1323, 16
        %v1716 = vpop.permute.xlu0 %1715
        %1717 = vrot.lane.b32.xlu0 %v1328, 16
        %v1718 = vpop.permute.xlu0 %1717
        %1719 = vrot.lane.b32.xlu0 %v1333, 16
        %v1720 = vpop.permute.xlu0 %1719
        %1721 = vrot.lane.b32.xlu0 %v1338, 16
        %v1722 = vpop.permute.xlu0 %1721
        %1723 = vrot.lane.b32.xlu0 %v1343, 16
        %v1724 = vpop.permute.xlu0 %1723
        %1725 = vrot.lane.b32.xlu0 %v1348, 16
        %v1726 = vpop.permute.xlu0 %1725
        %1727 = vrot.lane.b32.xlu0 %v1353, 16
        %v1728 = vpop.permute.xlu0 %1727
        %1729 = vrot.lane.b32.xlu0 %v1358, 16
        %v1730 = vpop.permute.xlu0 %1729
        %1731 = vrot.lane.b32.xlu0 %v1363, 16
        %v1732 = vpop.permute.xlu0 %1731
        %1733 = vrot.lane.b32.xlu0 %v1368, 16
        %v1734 = vpop.permute.xlu0 %1733
        %1735 = vrot.lane.b32.xlu0 %v1373, 16
        %v1736 = vpop.permute.xlu0 %1735
        %1737 = vrot.lane.b32.xlu0 %v1378, 16
        %v1738 = vpop.permute.xlu0 %1737
        %1739 = vrot.lane.b32.xlu0 %v1383, 16
        %v1740 = vpop.permute.xlu0 %1739
        %1741 = vrot.lane.b32.xlu0 %v1388, 16
        %v1742 = vpop.permute.xlu0 %1741
        %1743 = vrot.lane.b32.xlu0 %v1393, 16
        %v1744 = vpop.permute.xlu0 %1743
        %1745 = vrot.lane.b32.xlu0 %v1398, 16
        %v1746 = vpop.permute.xlu0 %1745
        %1747 = vrot.lane.b32.xlu0 %v1403, 16
        %v1748 = vpop.permute.xlu0 %1747
        %1749 = vrot.lane.b32.xlu0 %v1408, 16
        %v1750 = vpop.permute.xlu0 %1749
        %1751 = vrot.lane.b32.xlu0 %v1413, 16
        %v1752 = vpop.permute.xlu0 %1751
        %1753 = vrot.lane.b32.xlu0 %v1418, 16
        %v1754 = vpop.permute.xlu0 %1753
        %1755 = vrot.lane.b32.xlu0 %v1423, 16
        %v1756 = vpop.permute.xlu0 %1755
        %1757 = vrot.lane.b32.xlu0 %v1428, 16
        %v1758 = vpop.permute.xlu0 %1757
        %1759 = vrot.lane.b32.xlu0 %v1433, 16
        %v1760 = vpop.permute.xlu0 %1759
        %1761 = vrot.lane.b32.xlu0 %v1438, 16
        %v1762 = vpop.permute.xlu0 %1761
        %1763 = vrot.lane.b32.xlu0 %v1443, 16
        %v1764 = vpop.permute.xlu0 %1763
        %1765 = vrot.lane.b32.xlu0 %v1448, 16
        %v1766 = vpop.permute.xlu0 %1765
        %1767 = vrot.lane.b32.xlu0 %v1453, 16
        %v1768 = vpop.permute.xlu0 %1767
        %1769 = vrot.lane.b32.xlu0 %v1458, 16
        %v1770 = vpop.permute.xlu0 %1769
        %1771 = vrot.lane.b32.xlu0 %v1463, 16
        %v1772 = vpop.permute.xlu0 %1771
        %1773 = vrot.lane.b32.xlu0 %v1468, 16
        %v1774 = vpop.permute.xlu0 %1773
        %1775 = vrot.lane.b32.xlu0 %v1473, 16
        %v1776 = vpop.permute.xlu0 %1775
        %1777 = vrot.lane.b32.xlu0 %v1478, 16
        %v1778 = vpop.permute.xlu0 %1777
        %1779 = vrot.lane.b32.xlu0 %v1483, 16
        %v1780 = vpop.permute.xlu0 %1779
        %1781 = vrot.lane.b32.xlu0 %v1488, 16
        %v1782 = vpop.permute.xlu0 %1781
        %1783 = vrot.lane.b32.xlu0 %v1493, 16
        %v1784 = vpop.permute.xlu0 %1783
        %1785 = vrot.lane.b32.xlu0 %v1498, 16
        %v1786 = vpop.permute.xlu0 %1785
        %1787 = vrot.lane.b32.xlu0 %v1503, 16
        %v1788 = vpop.permute.xlu0 %1787
        %1789 = vrot.lane.b32.xlu0 %v1508, 16
        %v1790 = vpop.permute.xlu0 %1789
        %1791 = vrot.lane.b32.xlu0 %v1513, 16
        %v1792 = vpop.permute.xlu0 %1791
        %1793 = vrot.lane.b32.xlu0 %v1518, 16
        %v1794 = vpop.permute.xlu0 %1793
        %1795 = vrot.lane.b32.xlu0 %v1523, 16
        %v1796 = vpop.permute.xlu0 %1795
        %1797 = vrot.lane.b32.xlu0 %v1528, 16
        %v1798 = vpop.permute.xlu0 %1797
        %1799 = vrot.lane.b32.xlu0 %v1533, 16
        %v1800 = vpop.permute.xlu0 %1799
        %1801 = vrot.lane.b32.xlu0 %v1538, 16
        %v1802 = vpop.permute.xlu0 %1801
        %1803 = vrot.lane.b32.xlu0 %v1543, 16
        %v1804 = vpop.permute.xlu0 %1803
        %1805 = vrot.lane.b32.xlu0 %v1548, 16
        %v1806 = vpop.permute.xlu0 %1805
        %vm1871 = vcmask 212096
        %1872 = vst.msk [vmem:[%s226] sm:$0xff] %vm1871, %v1680
        %1873 = vst.msk [vmem:[%s226 + $0x8] sm:$0xff] %vm1871, %v1682
        %1874 = vst.msk [vmem:[%s226 + $0x10] sm:$0xff] %vm1871, %v1684
        %1875 = vst.msk [vmem:[%s226 + $0x18] sm:$0xff] %vm1871, %v1686
        %1876 = vst.msk [vmem:[%s226 + $0x20] sm:$0xff] %vm1871, %v1688
        %1877 = vst.msk [vmem:[%s226 + $0x28] sm:$0xff] %vm1871, %v1690
        %1878 = vst.msk [vmem:[%s226 + $0x30] sm:$0xff] %vm1871, %v1692
        %1879 = vst.msk [vmem:[%s226 + $0x38] sm:$0xff] %vm1871, %v1694
        %1880 = vst.msk [vmem:[%s226 + $0x40] sm:$0xff] %vm1871, %v1696
        %1881 = vst.msk [vmem:[%s226 + $0x48] sm:$0xff] %vm1871, %v1698
        %1882 = vst.msk [vmem:[%s226 + $0x50] sm:$0xff] %vm1871, %v1700
        %1883 = vst.msk [vmem:[%s226 + $0x58] sm:$0xff] %vm1871, %v1702
        %1884 = vst.msk [vmem:[%s226 + $0x60] sm:$0xff] %vm1871, %v1704
        %1885 = vst.msk [vmem:[%s226 + $0x68] sm:$0xff] %vm1871, %v1706
        %1886 = vst.msk [vmem:[%s226 + $0x70] sm:$0xff] %vm1871, %v1708
        %1887 = vst.msk [vmem:[%s226 + $0x78] sm:$0xff] %vm1871, %v1710
        %1888 = vst.msk [vmem:[%s226 + $0x80] sm:$0xff] %vm1871, %v1712
        %1889 = vst.msk [vmem:[%s226 + $0x88] sm:$0xff] %vm1871, %v1714
        %1890 = vst.msk [vmem:[%s226 + $0x90] sm:$0xff] %vm1871, %v1716
        %1891 = vst.msk [vmem:[%s226 + $0x98] sm:$0xff] %vm1871, %v1718
        %1892 = vst.msk [vmem:[%s226 + $0xa0] sm:$0xff] %vm1871, %v1720
        %1893 = vst.msk [vmem:[%s226 + $0xa8] sm:$0xff] %vm1871, %v1722
        %1894 = vst.msk [vmem:[%s226 + $0xb0] sm:$0xff] %vm1871, %v1724
        %1895 = vst.msk [vmem:[%s226 + $0xb8] sm:$0xff] %vm1871, %v1726
        %1896 = vst.msk [vmem:[%s226 + $0xc0] sm:$0xff] %vm1871, %v1728
        %1897 = vst.msk [vmem:[%s226 + $0xc8] sm:$0xff] %vm1871, %v1730
        %1898 = vst.msk [vmem:[%s226 + $0xd0] sm:$0xff] %vm1871, %v1732
        %1899 = vst.msk [vmem:[%s226 + $0xd8] sm:$0xff] %vm1871, %v1734
        %1900 = vst.msk [vmem:[%s226 + $0xe0] sm:$0xff] %vm1871, %v1736
        %1901 = vst.msk [vmem:[%s226 + $0xe8] sm:$0xff] %vm1871, %v1738
        %1902 = vst.msk [vmem:[%s226 + $0xf0] sm:$0xff] %vm1871, %v1740
        %1903 = vst.msk [vmem:[%s226 + $0xf8] sm:$0xff] %vm1871, %v1742
        %1904 = vst.msk [vmem:[%s226 + $0x100] sm:$0xff] %vm1871, %v1744
        %1905 = vst.msk [vmem:[%s226 + $0x108] sm:$0xff] %vm1871, %v1746
        %1906 = vst.msk [vmem:[%s226 + $0x110] sm:$0xff] %vm1871, %v1748
        %1907 = vst.msk [vmem:[%s226 + $0x118] sm:$0xff] %vm1871, %v1750
        %1908 = vst.msk [vmem:[%s226 + $0x120] sm:$0xff] %vm1871, %v1752
        %1909 = vst.msk [vmem:[%s226 + $0x128] sm:$0xff] %vm1871, %v1754
        %1910 = vst.msk [vmem:[%s226 + $0x130] sm:$0xff] %vm1871, %v1756
        %1911 = vst.msk [vmem:[%s226 + $0x138] sm:$0xff] %vm1871, %v1758
        %1912 = vst.msk [vmem:[%s226 + $0x140] sm:$0xff] %vm1871, %v1760
        %1913 = vst.msk [vmem:[%s226 + $0x148] sm:$0xff] %vm1871, %v1762
        %1914 = vst.msk [vmem:[%s226 + $0x150] sm:$0xff] %vm1871, %v1764
        %1915 = vst.msk [vmem:[%s226 + $0x158] sm:$0xff] %vm1871, %v1766
        %1916 = vst.msk [vmem:[%s226 + $0x160] sm:$0xff] %vm1871, %v1768
        %1917 = vst.msk [vmem:[%s226 + $0x168] sm:$0xff] %vm1871, %v1770
        %1918 = vst.msk [vmem:[%s226 + $0x170] sm:$0xff] %vm1871, %v1772
        %1919 = vst.msk [vmem:[%s226 + $0x178] sm:$0xff] %vm1871, %v1774
        %1920 = vst.msk [vmem:[%s226 + $0x180] sm:$0xff] %vm1871, %v1776
        %1921 = vst.msk [vmem:[%s226 + $0x188] sm:$0xff] %vm1871, %v1778
        %1922 = vst.msk [vmem:[%s226 + $0x190] sm:$0xff] %vm1871, %v1780
        %1923 = vst.msk [vmem:[%s226 + $0x198] sm:$0xff] %vm1871, %v1782
        %1924 = vst.msk [vmem:[%s226 + $0x1a0] sm:$0xff] %vm1871, %v1784
        %1925 = vst.msk [vmem:[%s226 + $0x1a8] sm:$0xff] %vm1871, %v1786
        %1926 = vst.msk [vmem:[%s226 + $0x1b0] sm:$0xff] %vm1871, %v1788
        %1927 = vst.msk [vmem:[%s226 + $0x1b8] sm:$0xff] %vm1871, %v1790
        %1928 = vst.msk [vmem:[%s226 + $0x1c0] sm:$0xff] %vm1871, %v1792
        %1929 = vst.msk [vmem:[%s226 + $0x1c8] sm:$0xff] %vm1871, %v1794
        %1930 = vst.msk [vmem:[%s226 + $0x1d0] sm:$0xff] %vm1871, %v1796
        %1931 = vst.msk [vmem:[%s226 + $0x1d8] sm:$0xff] %vm1871, %v1798
        %1932 = vst.msk [vmem:[%s226 + $0x1e0] sm:$0xff] %vm1871, %v1800
        %1933 = vst.msk [vmem:[%s226 + $0x1e8] sm:$0xff] %vm1871, %v1802
        %1934 = vst.msk [vmem:[%s226 + $0x1f0] sm:$0xff] %vm1871, %v1804
        %1935 = vst.msk [vmem:[%s226 + $0x1f8] sm:$0xff] %vm1871, %v1806
        %s1936 = sand.u32 %s134, 1
        %s1937 = sand.u32 %s134, 1
        %s1938 = smul.addr %s1937, 512
        %s1939 = scalar_lea.vmem [#allocation2], %s1938
        // Predicated region
        $region41: #{net3dseg_forward.1} parent=39 // pred_check
          %p1940 = pneg %p144
        $region42: #{net3dseg_forward.1} parent=39 // pred_check_branch
          %1942 = sbr.rel (%p1940) target = $region44
        $region43: #{net3dseg_forward.1} parent=39 // pred_region
          %s1943 = smul.u32 64, %s16
          %s1944 = ssub.s32 250, %s1943
          %p1945 = scmp.lt.s32.totalorder %s1944, 64
          %s1946 = scalar_select %p1945, %s1944, 64
          %s1947 = smul.u32 128, %s1946
          %p1948 = scmp.ne.s32.totalorder 0, %s1947
          %s1949 = smul.addr %s1943, 8
          %s1950 = scalar_lea.vmem %s5, %s1949
          // Predicated region
          $region45: #{net3dseg_forward.1} parent=43 // pred_check
            %p1951 = pneg %p1948
          $region46: #{net3dseg_forward.1} parent=43 // pred_check_branch
            %1953 = sbr.rel (%p1951) target = $region48
          $region47: #{net3dseg_forward.1} parent=43 // pred_region
            // Predicated region
            $region49: #{net3dseg_forward.1} parent=47 // pred_check
              _
            $region50: #{net3dseg_forward.1} parent=47 // pred_check_branch
              %1955 = sbr.rel (0) target = $region52
            $region51: #{net3dseg_forward.1} parent=47 // pred_region
              // Predicated region
              $region71: #{net3dseg_forward.1} parent=51 // pred_check
                _
              $region72: #{net3dseg_forward.1} parent=51 // pred_check_branch
                %2130 = sbr.rel (0) target = $region74
              $region73: #{net3dseg_forward.1} parent=51 // pred_region
                %s2131 = sshrl.u32 %s1946, 6
                // While loop
                $region75: #{net3dseg_forward.1} parent=73 // loop_pre_header
                  _
                $region76: #{net3dseg_forward.1} parent=73 // loop_header
                  %s2133 = sphi 0, %s2135
                  %p2134 = scmp.ge.s32.totalorder %s2133, %s2131
                  %s2138 = sphi 0, %s2271
                  %s2139 = sphi %s1939, %s2274
                  %s2140 = sphi %s1950, %s2275
                $region77: #{net3dseg_forward.1} parent=73 // loop_header_branch
                  %2137 = sbr.rel (%p2134) target = $region81
                $region78: #{net3dseg_forward.1} parent=73 // loop_body
                  %v2141 = vld [vmem:[%s2139] sm:$0xff]
                  %2142 = vst [vmem:[%s2140] sm:$0xff] %v2141
                  %v2143 = vld [vmem:[%s2139 + $0x8] sm:$0xff]
                  %2144 = vst [vmem:[%s2140 + $0x8] sm:$0xff] %v2143
                  %v2145 = vld [vmem:[%s2139 + $0x10] sm:$0xff]
                  %2146 = vst [vmem:[%s2140 + $0x10] sm:$0xff] %v2145
                  %v2147 = vld [vmem:[%s2139 + $0x18] sm:$0xff]
                  %2148 = vst [vmem:[%s2140 + $0x18] sm:$0xff] %v2147
                  %v2149 = vld [vmem:[%s2139 + $0x20] sm:$0xff]
                  %2150 = vst [vmem:[%s2140 + $0x20] sm:$0xff] %v2149
                  %v2151 = vld [vmem:[%s2139 + $0x28] sm:$0xff]
                  %2152 = vst [vmem:[%s2140 + $0x28] sm:$0xff] %v2151
                  %v2153 = vld [vmem:[%s2139 + $0x30] sm:$0xff]
                  %2154 = vst [vmem:[%s2140 + $0x30] sm:$0xff] %v2153
                  %v2155 = vld [vmem:[%s2139 + $0x38] sm:$0xff]
                  %2156 = vst [vmem:[%s2140 + $0x38] sm:$0xff] %v2155
                  %v2157 = vld [vmem:[%s2139 + $0x40] sm:$0xff]
                  %2158 = vst [vmem:[%s2140 + $0x40] sm:$0xff] %v2157
                  %v2159 = vld [vmem:[%s2139 + $0x48] sm:$0xff]
                  %2160 = vst [vmem:[%s2140 + $0x48] sm:$0xff] %v2159
                  %v2161 = vld [vmem:[%s2139 + $0x50] sm:$0xff]
                  %2162 = vst [vmem:[%s2140 + $0x50] sm:$0xff] %v2161
                  %v2163 = vld [vmem:[%s2139 + $0x58] sm:$0xff]
                  %2164 = vst [vmem:[%s2140 + $0x58] sm:$0xff] %v2163
                  %v2165 = vld [vmem:[%s2139 + $0x60] sm:$0xff]
                  %2166 = vst [vmem:[%s2140 + $0x60] sm:$0xff] %v2165
                  %v2167 = vld [vmem:[%s2139 + $0x68] sm:$0xff]
                  %2168 = vst [vmem:[%s2140 + $0x68] sm:$0xff] %v2167
                  %v2169 = vld [vmem:[%s2139 + $0x70] sm:$0xff]
                  %2170 = vst [vmem:[%s2140 + $0x70] sm:$0xff] %v2169
                  %v2171 = vld [vmem:[%s2139 + $0x78] sm:$0xff]
                  %2172 = vst [vmem:[%s2140 + $0x78] sm:$0xff] %v2171
                  %v2173 = vld [vmem:[%s2139 + $0x80] sm:$0xff]
                  %2174 = vst [vmem:[%s2140 + $0x80] sm:$0xff] %v2173
                  %v2175 = vld [vmem:[%s2139 + $0x88] sm:$0xff]
                  %2176 = vst [vmem:[%s2140 + $0x88] sm:$0xff] %v2175
                  %v2177 = vld [vmem:[%s2139 + $0x90] sm:$0xff]
                  %2178 = vst [vmem:[%s2140 + $0x90] sm:$0xff] %v2177
                  %v2179 = vld [vmem:[%s2139 + $0x98] sm:$0xff]
                  %2180 = vst [vmem:[%s2140 + $0x98] sm:$0xff] %v2179
                  %v2181 = vld [vmem:[%s2139 + $0xa0] sm:$0xff]
                  %2182 = vst [vmem:[%s2140 + $0xa0] sm:$0xff] %v2181
                  %v2183 = vld [vmem:[%s2139 + $0xa8] sm:$0xff]
                  %2184 = vst [vmem:[%s2140 + $0xa8] sm:$0xff] %v2183
                  %v2185 = vld [vmem:[%s2139 + $0xb0] sm:$0xff]
                  %2186 = vst [vmem:[%s2140 + $0xb0] sm:$0xff] %v2185
                  %v2187 = vld [vmem:[%s2139 + $0xb8] sm:$0xff]
                  %2188 = vst [vmem:[%s2140 + $0xb8] sm:$0xff] %v2187
                  %v2189 = vld [vmem:[%s2139 + $0xc0] sm:$0xff]
                  %2190 = vst [vmem:[%s2140 + $0xc0] sm:$0xff] %v2189
                  %v2191 = vld [vmem:[%s2139 + $0xc8] sm:$0xff]
                  %2192 = vst [vmem:[%s2140 + $0xc8] sm:$0xff] %v2191
                  %v2193 = vld [vmem:[%s2139 + $0xd0] sm:$0xff]
                  %2194 = vst [vmem:[%s2140 + $0xd0] sm:$0xff] %v2193
                  %v2195 = vld [vmem:[%s2139 + $0xd8] sm:$0xff]
                  %2196 = vst [vmem:[%s2140 + $0xd8] sm:$0xff] %v2195
                  %v2197 = vld [vmem:[%s2139 + $0xe0] sm:$0xff]
                  %2198 = vst [vmem:[%s2140 + $0xe0] sm:$0xff] %v2197
                  %v2199 = vld [vmem:[%s2139 + $0xe8] sm:$0xff]
                  %2200 = vst [vmem:[%s2140 + $0xe8] sm:$0xff] %v2199
                  %v2201 = vld [vmem:[%s2139 + $0xf0] sm:$0xff]
                  %2202 = vst [vmem:[%s2140 + $0xf0] sm:$0xff] %v2201
                  %v2203 = vld [vmem:[%s2139 + $0xf8] sm:$0xff]
                  %2204 = vst [vmem:[%s2140 + $0xf8] sm:$0xff] %v2203
                  %v2205 = vld [vmem:[%s2139 + $0x100] sm:$0xff]
                  %2206 = vst [vmem:[%s2140 + $0x100] sm:$0xff] %v2205
                  %v2207 = vld [vmem:[%s2139 + $0x108] sm:$0xff]
                  %2208 = vst [vmem:[%s2140 + $0x108] sm:$0xff] %v2207
                  %v2209 = vld [vmem:[%s2139 + $0x110] sm:$0xff]
                  %2210 = vst [vmem:[%s2140 + $0x110] sm:$0xff] %v2209
                  %v2211 = vld [vmem:[%s2139 + $0x118] sm:$0xff]
                  %2212 = vst [vmem:[%s2140 + $0x118] sm:$0xff] %v2211
                  %v2213 = vld [vmem:[%s2139 + $0x120] sm:$0xff]
                  %2214 = vst [vmem:[%s2140 + $0x120] sm:$0xff] %v2213
                  %v2215 = vld [vmem:[%s2139 + $0x128] sm:$0xff]
                  %2216 = vst [vmem:[%s2140 + $0x128] sm:$0xff] %v2215
                  %v2217 = vld [vmem:[%s2139 + $0x130] sm:$0xff]
                  %2218 = vst [vmem:[%s2140 + $0x130] sm:$0xff] %v2217
                  %v2219 = vld [vmem:[%s2139 + $0x138] sm:$0xff]
                  %2220 = vst [vmem:[%s2140 + $0x138] sm:$0xff] %v2219
                  %v2221 = vld [vmem:[%s2139 + $0x140] sm:$0xff]
                  %2222 = vst [vmem:[%s2140 + $0x140] sm:$0xff] %v2221
                  %v2223 = vld [vmem:[%s2139 + $0x148] sm:$0xff]
                  %2224 = vst [vmem:[%s2140 + $0x148] sm:$0xff] %v2223
                  %v2225 = vld [vmem:[%s2139 + $0x150] sm:$0xff]
                  %2226 = vst [vmem:[%s2140 + $0x150] sm:$0xff] %v2225
                  %v2227 = vld [vmem:[%s2139 + $0x158] sm:$0xff]
                  %2228 = vst [vmem:[%s2140 + $0x158] sm:$0xff] %v2227
                  %v2229 = vld [vmem:[%s2139 + $0x160] sm:$0xff]
                  %2230 = vst [vmem:[%s2140 + $0x160] sm:$0xff] %v2229
                  %v2231 = vld [vmem:[%s2139 + $0x168] sm:$0xff]
                  %2232 = vst [vmem:[%s2140 + $0x168] sm:$0xff] %v2231
                  %v2233 = vld [vmem:[%s2139 + $0x170] sm:$0xff]
                  %2234 = vst [vmem:[%s2140 + $0x170] sm:$0xff] %v2233
                  %v2235 = vld [vmem:[%s2139 + $0x178] sm:$0xff]
                  %2236 = vst [vmem:[%s2140 + $0x178] sm:$0xff] %v2235
                  %v2237 = vld [vmem:[%s2139 + $0x180] sm:$0xff]
                  %2238 = vst [vmem:[%s2140 + $0x180] sm:$0xff] %v2237
                  %v2239 = vld [vmem:[%s2139 + $0x188] sm:$0xff]
                  %2240 = vst [vmem:[%s2140 + $0x188] sm:$0xff] %v2239
                  %v2241 = vld [vmem:[%s2139 + $0x190] sm:$0xff]
                  %2242 = vst [vmem:[%s2140 + $0x190] sm:$0xff] %v2241
                  %v2243 = vld [vmem:[%s2139 + $0x198] sm:$0xff]
                  %2244 = vst [vmem:[%s2140 + $0x198] sm:$0xff] %v2243
                  %v2245 = vld [vmem:[%s2139 + $0x1a0] sm:$0xff]
                  %2246 = vst [vmem:[%s2140 + $0x1a0] sm:$0xff] %v2245
                  %v2247 = vld [vmem:[%s2139 + $0x1a8] sm:$0xff]
                  %2248 = vst [vmem:[%s2140 + $0x1a8] sm:$0xff] %v2247
                  %v2249 = vld [vmem:[%s2139 + $0x1b0] sm:$0xff]
                  %2250 = vst [vmem:[%s2140 + $0x1b0] sm:$0xff] %v2249
                  %v2251 = vld [vmem:[%s2139 + $0x1b8] sm:$0xff]
                  %2252 = vst [vmem:[%s2140 + $0x1b8] sm:$0xff] %v2251
                  %v2253 = vld [vmem:[%s2139 + $0x1c0] sm:$0xff]
                  %2254 = vst [vmem:[%s2140 + $0x1c0] sm:$0xff] %v2253
                  %v2255 = vld [vmem:[%s2139 + $0x1c8] sm:$0xff]
                  %2256 = vst [vmem:[%s2140 + $0x1c8] sm:$0xff] %v2255
                  %v2257 = vld [vmem:[%s2139 + $0x1d0] sm:$0xff]
                  %2258 = vst [vmem:[%s2140 + $0x1d0] sm:$0xff] %v2257
                  %v2259 = vld [vmem:[%s2139 + $0x1d8] sm:$0xff]
                  %2260 = vst [vmem:[%s2140 + $0x1d8] sm:$0xff] %v2259
                  %v2261 = vld [vmem:[%s2139 + $0x1e0] sm:$0xff]
                  %2262 = vst [vmem:[%s2140 + $0x1e0] sm:$0xff] %v2261
                  %v2263 = vld [vmem:[%s2139 + $0x1e8] sm:$0xff]
                  %2264 = vst [vmem:[%s2140 + $0x1e8] sm:$0xff] %v2263
                  %v2265 = vld [vmem:[%s2139 + $0x1f0] sm:$0xff]
                  %2266 = vst [vmem:[%s2140 + $0x1f0] sm:$0xff] %v2265
                  %v2267 = vld [vmem:[%s2139 + $0x1f8] sm:$0xff]
                  %2268 = vst [vmem:[%s2140 + $0x1f8] sm:$0xff] %v2267
                  %s2269 = sadd.s32 1, %s2138
                  %p2270 = scmp.ge.s32.totalorder %s2269, %s2131
                  %s2271 = scalar_select %p2270, 0, %s2269
                  %s2272 = smul.u32 %s2271, 512
                  %s2273 = smul.u32 %s2271, 512
                  %s2274 = scalar_lea.vmem %s1939, %s2272 [#allocation2]
                  %s2275 = scalar_lea.vmem %s1950, %s2273
                $region79: #{net3dseg_forward.1} parent=73 // loop_footer
                  %s2135 = sadd.s32 %s2133, 1
                $region80: #{net3dseg_forward.1} parent=73 // loop_footer_branch
                  %2132 = sbr.rel target = $region76
                $region81: #{net3dseg_forward.1} parent=73 // loop_exit
                  _
                %s2276 = sshrl.u32 %s1946, 6
                %s2277 = sand.u32 %s1946, 63
                %s2278 = smul.u32 %s2276, 64
                %s2279 = smul.u32 8, %s2278
                %s2280 = scalar_lea.vmem %s1939, %s2279 [#allocation2]
                %s2281 = smul.u32 8, %s2278
                %s2282 = scalar_lea.vmem %s1950, %s2281
                // While loop
                $region82: #{net3dseg_forward.1} parent=73 // loop_pre_header
                  _
                $region83: #{net3dseg_forward.1} parent=73 // loop_header
                  %s2284 = sphi 0, %s2286
                  %p2285 = scmp.ge.s32.totalorder %s2284, %s2277
                  %s2289 = sphi 0, %s2296
                  %s2290 = sphi %s2280, %s2299
                  %s2291 = sphi %s2282, %s2300
                $region84: #{net3dseg_forward.1} parent=73 // loop_header_branch
                  %2288 = sbr.rel (%p2285) target = $region88
                $region85: #{net3dseg_forward.1} parent=73 // loop_body
                  %v2292 = vld [vmem:[%s2290] sm:$0xff]
                  %2293 = vst [vmem:[%s2291] sm:$0xff] %v2292
                  %s2294 = sadd.s32 1, %s2289
                  %p2295 = scmp.ge.s32.totalorder %s2294, %s2277
                  %s2296 = scalar_select %p2295, 0, %s2294
                  %s2297 = smul.u32 %s2296, 8
                  %s2298 = smul.u32 %s2296, 8
                  %s2299 = scalar_lea.vmem %s2280, %s2297 [#allocation2]
                  %s2300 = scalar_lea.vmem %s2282, %s2298
                $region86: #{net3dseg_forward.1} parent=73 // loop_footer
                  %s2286 = sadd.s32 %s2284, 1
                $region87: #{net3dseg_forward.1} parent=73 // loop_footer_branch
                  %2283 = sbr.rel target = $region83
                $region88: #{net3dseg_forward.1} parent=73 // loop_exit
                  _
              $region74: #{net3dseg_forward.1} parent=51 // pred_fallthru
                _
              // Predicated region
              $region89: #{net3dseg_forward.1} parent=51 // pred_check
                _
              $region90: #{net3dseg_forward.1} parent=51 // pred_check_branch
                %2302 = sbr.rel target = $region92
              $region91: #{net3dseg_forward.1} parent=51 // pred_region
                _
              $region92: #{net3dseg_forward.1} parent=51 // pred_fallthru
                _
            $region52: #{net3dseg_forward.1} parent=47 // pred_fallthru
              _
            // Predicated region
            $region53: #{net3dseg_forward.1} parent=47 // pred_check
              _
            $region54: #{net3dseg_forward.1} parent=47 // pred_check_branch
              %1957 = sbr.rel target = $region56
            $region55: #{net3dseg_forward.1} parent=47 // pred_region
              %s1959 = sshrl.u32 %s1946, 6
              // While loop
              $region57: #{net3dseg_forward.1} parent=55 // loop_pre_header
                _
              $region58: #{net3dseg_forward.1} parent=55 // loop_header
                %s1961 = sphi 0, %s1963
                %p1962 = scmp.ge.s32.totalorder %s1961, %s1959
                %s1966 = sphi 0, %s2099
                %s1967 = sphi %s1939, %s2102
                %s1968 = sphi %s1950, %s2103
              $region59: #{net3dseg_forward.1} parent=55 // loop_header_branch
                %1965 = sbr.rel (%p1962) target = $region63
              $region60: #{net3dseg_forward.1} parent=55 // loop_body
                %v1969 = vld [vmem:[%s1967] sm:$0xff]
                %1970 = vst [vmem:[%s1968] sm:$0xff] %v1969
                %v1971 = vld [vmem:[%s1967 + $0x8] sm:$0xff]
                %1972 = vst [vmem:[%s1968 + $0x8] sm:$0xff] %v1971
                %v1973 = vld [vmem:[%s1967 + $0x10] sm:$0xff]
                %1974 = vst [vmem:[%s1968 + $0x10] sm:$0xff] %v1973
                %v1975 = vld [vmem:[%s1967 + $0x18] sm:$0xff]
                %1976 = vst [vmem:[%s1968 + $0x18] sm:$0xff] %v1975
                %v1977 = vld [vmem:[%s1967 + $0x20] sm:$0xff]
                %1978 = vst [vmem:[%s1968 + $0x20] sm:$0xff] %v1977
                %v1979 = vld [vmem:[%s1967 + $0x28] sm:$0xff]
                %1980 = vst [vmem:[%s1968 + $0x28] sm:$0xff] %v1979
                %v1981 = vld [vmem:[%s1967 + $0x30] sm:$0xff]
                %1982 = vst [vmem:[%s1968 + $0x30] sm:$0xff] %v1981
                %v1983 = vld [vmem:[%s1967 + $0x38] sm:$0xff]
                %1984 = vst [vmem:[%s1968 + $0x38] sm:$0xff] %v1983
                %v1985 = vld [vmem:[%s1967 + $0x40] sm:$0xff]
                %1986 = vst [vmem:[%s1968 + $0x40] sm:$0xff] %v1985
                %v1987 = vld [vmem:[%s1967 + $0x48] sm:$0xff]
                %1988 = vst [vmem:[%s1968 + $0x48] sm:$0xff] %v1987
                %v1989 = vld [vmem:[%s1967 + $0x50] sm:$0xff]
                %1990 = vst [vmem:[%s1968 + $0x50] sm:$0xff] %v1989
                %v1991 = vld [vmem:[%s1967 + $0x58] sm:$0xff]
                %1992 = vst [vmem:[%s1968 + $0x58] sm:$0xff] %v1991
                %v1993 = vld [vmem:[%s1967 + $0x60] sm:$0xff]
                %1994 = vst [vmem:[%s1968 + $0x60] sm:$0xff] %v1993
                %v1995 = vld [vmem:[%s1967 + $0x68] sm:$0xff]
                %1996 = vst [vmem:[%s1968 + $0x68] sm:$0xff] %v1995
                %v1997 = vld [vmem:[%s1967 + $0x70] sm:$0xff]
                %1998 = vst [vmem:[%s1968 + $0x70] sm:$0xff] %v1997
                %v1999 = vld [vmem:[%s1967 + $0x78] sm:$0xff]
                %2000 = vst [vmem:[%s1968 + $0x78] sm:$0xff] %v1999
                %v2001 = vld [vmem:[%s1967 + $0x80] sm:$0xff]
                %2002 = vst [vmem:[%s1968 + $0x80] sm:$0xff] %v2001
                %v2003 = vld [vmem:[%s1967 + $0x88] sm:$0xff]
                %2004 = vst [vmem:[%s1968 + $0x88] sm:$0xff] %v2003
                %v2005 = vld [vmem:[%s1967 + $0x90] sm:$0xff]
                %2006 = vst [vmem:[%s1968 + $0x90] sm:$0xff] %v2005
                %v2007 = vld [vmem:[%s1967 + $0x98] sm:$0xff]
                %2008 = vst [vmem:[%s1968 + $0x98] sm:$0xff] %v2007
                %v2009 = vld [vmem:[%s1967 + $0xa0] sm:$0xff]
                %2010 = vst [vmem:[%s1968 + $0xa0] sm:$0xff] %v2009
                %v2011 = vld [vmem:[%s1967 + $0xa8] sm:$0xff]
                %2012 = vst [vmem:[%s1968 + $0xa8] sm:$0xff] %v2011
                %v2013 = vld [vmem:[%s1967 + $0xb0] sm:$0xff]
                %2014 = vst [vmem:[%s1968 + $0xb0] sm:$0xff] %v2013
                %v2015 = vld [vmem:[%s1967 + $0xb8] sm:$0xff]
                %2016 = vst [vmem:[%s1968 + $0xb8] sm:$0xff] %v2015
                %v2017 = vld [vmem:[%s1967 + $0xc0] sm:$0xff]
                %2018 = vst [vmem:[%s1968 + $0xc0] sm:$0xff] %v2017
                %v2019 = vld [vmem:[%s1967 + $0xc8] sm:$0xff]
                %2020 = vst [vmem:[%s1968 + $0xc8] sm:$0xff] %v2019
                %v2021 = vld [vmem:[%s1967 + $0xd0] sm:$0xff]
                %2022 = vst [vmem:[%s1968 + $0xd0] sm:$0xff] %v2021
                %v2023 = vld [vmem:[%s1967 + $0xd8] sm:$0xff]
                %2024 = vst [vmem:[%s1968 + $0xd8] sm:$0xff] %v2023
                %v2025 = vld [vmem:[%s1967 + $0xe0] sm:$0xff]
                %2026 = vst [vmem:[%s1968 + $0xe0] sm:$0xff] %v2025
                %v2027 = vld [vmem:[%s1967 + $0xe8] sm:$0xff]
                %2028 = vst [vmem:[%s1968 + $0xe8] sm:$0xff] %v2027
                %v2029 = vld [vmem:[%s1967 + $0xf0] sm:$0xff]
                %2030 = vst [vmem:[%s1968 + $0xf0] sm:$0xff] %v2029
                %v2031 = vld [vmem:[%s1967 + $0xf8] sm:$0xff]
                %2032 = vst [vmem:[%s1968 + $0xf8] sm:$0xff] %v2031
                %v2033 = vld [vmem:[%s1967 + $0x100] sm:$0xff]
                %2034 = vst [vmem:[%s1968 + $0x100] sm:$0xff] %v2033
                %v2035 = vld [vmem:[%s1967 + $0x108] sm:$0xff]
                %2036 = vst [vmem:[%s1968 + $0x108] sm:$0xff] %v2035
                %v2037 = vld [vmem:[%s1967 + $0x110] sm:$0xff]
                %2038 = vst [vmem:[%s1968 + $0x110] sm:$0xff] %v2037
                %v2039 = vld [vmem:[%s1967 + $0x118] sm:$0xff]
                %2040 = vst [vmem:[%s1968 + $0x118] sm:$0xff] %v2039
                %v2041 = vld [vmem:[%s1967 + $0x120] sm:$0xff]
                %2042 = vst [vmem:[%s1968 + $0x120] sm:$0xff] %v2041
                %v2043 = vld [vmem:[%s1967 + $0x128] sm:$0xff]
                %2044 = vst [vmem:[%s1968 + $0x128] sm:$0xff] %v2043
                %v2045 = vld [vmem:[%s1967 + $0x130] sm:$0xff]
                %2046 = vst [vmem:[%s1968 + $0x130] sm:$0xff] %v2045
                %v2047 = vld [vmem:[%s1967 + $0x138] sm:$0xff]
                %2048 = vst [vmem:[%s1968 + $0x138] sm:$0xff] %v2047
                %v2049 = vld [vmem:[%s1967 + $0x140] sm:$0xff]
                %2050 = vst [vmem:[%s1968 + $0x140] sm:$0xff] %v2049
                %v2051 = vld [vmem:[%s1967 + $0x148] sm:$0xff]
                %2052 = vst [vmem:[%s1968 + $0x148] sm:$0xff] %v2051
                %v2053 = vld [vmem:[%s1967 + $0x150] sm:$0xff]
                %2054 = vst [vmem:[%s1968 + $0x150] sm:$0xff] %v2053
                %v2055 = vld [vmem:[%s1967 + $0x158] sm:$0xff]
                %2056 = vst [vmem:[%s1968 + $0x158] sm:$0xff] %v2055
                %v2057 = vld [vmem:[%s1967 + $0x160] sm:$0xff]
                %2058 = vst [vmem:[%s1968 + $0x160] sm:$0xff] %v2057
                %v2059 = vld [vmem:[%s1967 + $0x168] sm:$0xff]
                %2060 = vst [vmem:[%s1968 + $0x168] sm:$0xff] %v2059
                %v2061 = vld [vmem:[%s1967 + $0x170] sm:$0xff]
                %2062 = vst [vmem:[%s1968 + $0x170] sm:$0xff] %v2061
                %v2063 = vld [vmem:[%s1967 + $0x178] sm:$0xff]
                %2064 = vst [vmem:[%s1968 + $0x178] sm:$0xff] %v2063
                %v2065 = vld [vmem:[%s1967 + $0x180] sm:$0xff]
                %2066 = vst [vmem:[%s1968 + $0x180] sm:$0xff] %v2065
                %v2067 = vld [vmem:[%s1967 + $0x188] sm:$0xff]
                %2068 = vst [vmem:[%s1968 + $0x188] sm:$0xff] %v2067
                %v2069 = vld [vmem:[%s1967 + $0x190] sm:$0xff]
                %2070 = vst [vmem:[%s1968 + $0x190] sm:$0xff] %v2069
                %v2071 = vld [vmem:[%s1967 + $0x198] sm:$0xff]
                %2072 = vst [vmem:[%s1968 + $0x198] sm:$0xff] %v2071
                %v2073 = vld [vmem:[%s1967 + $0x1a0] sm:$0xff]
                %2074 = vst [vmem:[%s1968 + $0x1a0] sm:$0xff] %v2073
                %v2075 = vld [vmem:[%s1967 + $0x1a8] sm:$0xff]
                %2076 = vst [vmem:[%s1968 + $0x1a8] sm:$0xff] %v2075
                %v2077 = vld [vmem:[%s1967 + $0x1b0] sm:$0xff]
                %2078 = vst [vmem:[%s1968 + $0x1b0] sm:$0xff] %v2077
                %v2079 = vld [vmem:[%s1967 + $0x1b8] sm:$0xff]
                %2080 = vst [vmem:[%s1968 + $0x1b8] sm:$0xff] %v2079
                %v2081 = vld [vmem:[%s1967 + $0x1c0] sm:$0xff]
                %2082 = vst [vmem:[%s1968 + $0x1c0] sm:$0xff] %v2081
                %v2083 = vld [vmem:[%s1967 + $0x1c8] sm:$0xff]
                %2084 = vst [vmem:[%s1968 + $0x1c8] sm:$0xff] %v2083
                %v2085 = vld [vmem:[%s1967 + $0x1d0] sm:$0xff]
                %2086 = vst [vmem:[%s1968 + $0x1d0] sm:$0xff] %v2085
                %v2087 = vld [vmem:[%s1967 + $0x1d8] sm:$0xff]
                %2088 = vst [vmem:[%s1968 + $0x1d8] sm:$0xff] %v2087
                %v2089 = vld [vmem:[%s1967 + $0x1e0] sm:$0xff]
                %2090 = vst [vmem:[%s1968 + $0x1e0] sm:$0xff] %v2089
                %v2091 = vld [vmem:[%s1967 + $0x1e8] sm:$0xff]
                %2092 = vst [vmem:[%s1968 + $0x1e8] sm:$0xff] %v2091
                %v2093 = vld [vmem:[%s1967 + $0x1f0] sm:$0xff]
                %2094 = vst [vmem:[%s1968 + $0x1f0] sm:$0xff] %v2093
                %v2095 = vld [vmem:[%s1967 + $0x1f8] sm:$0xff]
                %2096 = vst [vmem:[%s1968 + $0x1f8] sm:$0xff] %v2095
                %s2097 = sadd.s32 1, %s1966
                %p2098 = scmp.ge.s32.totalorder %s2097, %s1959
                %s2099 = scalar_select %p2098, 0, %s2097
                %s2100 = smul.u32 %s2099, 512
                %s2101 = smul.u32 %s2099, 512
                %s2102 = scalar_lea.vmem %s1939, %s2100 [#allocation2]
                %s2103 = scalar_lea.vmem %s1950, %s2101
              $region61: #{net3dseg_forward.1} parent=55 // loop_footer
                %s1963 = sadd.s32 %s1961, 1
              $region62: #{net3dseg_forward.1} parent=55 // loop_footer_branch
                %1960 = sbr.rel target = $region58
              $region63: #{net3dseg_forward.1} parent=55 // loop_exit
                _
              %s2104 = sshrl.u32 %s1946, 6
              %s2105 = sand.u32 %s1946, 63
              %s2106 = smul.u32 %s2104, 64
              %s2107 = smul.u32 8, %s2106
              %s2108 = scalar_lea.vmem %s1939, %s2107 [#allocation2]
              %s2109 = smul.u32 8, %s2106
              %s2110 = scalar_lea.vmem %s1950, %s2109
              // While loop
              $region64: #{net3dseg_forward.1} parent=55 // loop_pre_header
                _
              $region65: #{net3dseg_forward.1} parent=55 // loop_header
                %s2112 = sphi 0, %s2114
                %p2113 = scmp.ge.s32.totalorder %s2112, %s2105
                %s2117 = sphi 0, %s2124
                %s2118 = sphi %s2108, %s2127
                %s2119 = sphi %s2110, %s2128
              $region66: #{net3dseg_forward.1} parent=55 // loop_header_branch
                %2116 = sbr.rel (%p2113) target = $region70
              $region67: #{net3dseg_forward.1} parent=55 // loop_body
                %v2120 = vld [vmem:[%s2118] sm:$0xff]
                %2121 = vst [vmem:[%s2119] sm:$0xff] %v2120
                %s2122 = sadd.s32 1, %s2117
                %p2123 = scmp.ge.s32.totalorder %s2122, %s2105
                %s2124 = scalar_select %p2123, 0, %s2122
                %s2125 = smul.u32 %s2124, 8
                %s2126 = smul.u32 %s2124, 8
                %s2127 = scalar_lea.vmem %s2108, %s2125 [#allocation2]
                %s2128 = scalar_lea.vmem %s2110, %s2126
              $region68: #{net3dseg_forward.1} parent=55 // loop_footer
                %s2114 = sadd.s32 %s2112, 1
              $region69: #{net3dseg_forward.1} parent=55 // loop_footer_branch
                %2111 = sbr.rel target = $region65
              $region70: #{net3dseg_forward.1} parent=55 // loop_exit
                _
            $region56: #{net3dseg_forward.1} parent=47 // pred_fallthru
              _
          $region48: #{net3dseg_forward.1} parent=43 // pred_fallthru
            _
          %2303 = vnop
        $region44: #{net3dseg_forward.1} parent=39 // pred_fallthru
          _
      $region40: #{net3dseg_forward.1} parent=5 // pred_fallthru
        _
      %p2304 = scmp.le.s32.totalorder 2, %s11
      // Predicated region
      $region93: #{net3dseg_forward.1} parent=5 // pred_check
        %p2305 = pneg %p2304
      $region94: #{net3dseg_forward.1} parent=5 // pred_check_branch
        %2307 = sbr.rel (%p2305) target = $region96
      $region95: #{net3dseg_forward.1} parent=5 // pred_region
        %s2308 = ssub.s32 %s11, 2
        // Predicated region
        $region97: #{net3dseg_forward.1} parent=95 // pred_check
          %p2309 = pneg %p150
        $region98: #{net3dseg_forward.1} parent=95 // pred_check_branch
          %2311 = sbr.rel (%p2309) target = $region100
        $region99: #{net3dseg_forward.1} parent=95 // pred_region
          %s2312 = sand.u32 %s135, 1
          %s2313 = sand.u32 %s135, 1
          %s2314 = smul.addr %s2313, 512
          %s2315 = scalar_lea.vmem [#allocation2], %s2314
        $region100: #{net3dseg_forward.1} parent=95 // pred_fallthru
          _
      $region96: #{net3dseg_forward.1} parent=5 // pred_fallthru
        _
    $region6: #{net3dseg_forward.1} parent=1 // loop_footer
      %s15 = sadd.s32 1, %s11
    $region7: #{net3dseg_forward.1} parent=1 // loop_footer_branch
      %10 = sbr.rel target = $region3
    $region8: #{net3dseg_forward.1} parent=1 // loop_exit
      _

</llo_original>
